<compile_context>
chip_gen: v7x
topology: tpu7x:2x2x1
jax: 0.10.0
libtpu: 0.0.40
codegen_flags: <defaults>
</compile_context>

<pallas_src>
import functools

import jax
import jax.numpy as jnp
import numpy as np
from jax.experimental import pallas as pl
from jax.experimental.pallas import tpu as pltpu

# ---- problem sizes (small, but structurally faithful: 768 -> 512) ----------
B = 2          # batch
S = 8          # max_src_length (sequence length)
D_SEN = 768    # sentence-embedding width (BERT-like)
D_MODEL = 512  # T5 d_model
VOCAB = 512    # len(tokenizer)  (small synthetic vocab)
SEN_ID = 500   # tokenizer.encode('<SEN>')[0]


def _joint_embed_kernel(ids_ref, sen_ref, wproj_ref, emb_ref, out_ref, *, sen_id):
    """One grid step over a tile of TM flattened tokens.

    ids_ref  : (TM, 1)            int32   token ids for this tile
    sen_ref  : (TM, D_SEN)        float32 sentence embeddings for this tile
    wproj_ref: (D_SEN, D_MODEL)   float32 projection weight (Linear.weight.T)
    emb_ref  : (VOCAB, D_MODEL)   float32 T5 shared embedding table (VMEM-resident)
    out_ref  : (TM, D_MODEL)      float32 joint word embeddings for this tile
    """
    tm = ids_ref.shape[0]
    vocab = emb_ref.shape[0]

    # --- sentence-embedding projection (MXU, f32 accumulation) --------------
    proj = jnp.dot(sen_ref[...], wproj_ref[...],
                   preferred_element_type=jnp.float32)        # (TM, D_MODEL)

    # --- embedding lookup: plot_ids -> one-hot -> tiny MXU matmul -----------
    ids = ids_ref[...]                                        # (TM, 1) int32
    plot_ids = jnp.where(ids != sen_id, ids, 0)               # (TM, 1)
    onehot = (jax.lax.broadcasted_iota(jnp.int32, (tm, vocab), 1)
              == plot_ids).astype(jnp.float32)                # (TM, VOCAB)
    word = jnp.dot(onehot, emb_ref[...],
                   preferred_element_type=jnp.float32)        # (TM, D_MODEL)

    # jointwordembeddings = where(senembeddings_projected != 0, proj, word)
    out_ref[...] = jnp.where(proj != 0.0, proj, word)


def joint_embeddings(input_ids, senembeddings, w_proj_t, t5_embeddings,
                     sen_id=SEN_ID, *, tm=128):
    """input_ids: (B, S) int32; senembeddings: (B, S, 768) f32;
       w_proj_t: (768, 512) f32 (torch Linear.weight.T);
       t5_embeddings: (VOCAB, 512) f32 (shared.weight).
       Returns jointwordembeddings: (B, S, 512) f32."""
    b, s = input_ids.shape
    d_sen = senembeddings.shape[-1]
    vocab, d_model = t5_embeddings.shape
    nt = b * s

    # tile the flattened token axis; keep tiles sublane-aligned (multiple of 8)
    tm = min(tm, max(8, ((nt + 7) // 8) * 8))
    nt_pad = pl.cdiv(nt, tm) * tm

    ids = input_ids.astype(jnp.int32).reshape(nt, 1)
    sen = senembeddings.astype(jnp.float32).reshape(nt, d_sen)
    if nt_pad != nt:
        ids = jnp.pad(ids, ((0, nt_pad - nt), (0, 0)))
        sen = jnp.pad(sen, ((0, nt_pad - nt), (0, 0)))

    grid = (nt_pad // tm,)

    out = pl.pallas_call(
        functools.partial(_joint_embed_kernel, sen_id=sen_id),
        out_shape=jax.ShapeDtypeStruct((nt_pad, d_model), jnp.float32),
        grid_spec=pl.GridSpec(
            grid=grid,
            in_specs=[
                pl.BlockSpec((tm, 1), lambda i: (i, 0)),            # token ids
                pl.BlockSpec((tm, d_sen), lambda i: (i, 0)),        # sen embeds
                pl.BlockSpec((d_sen, d_model), lambda i: (0, 0)),   # W_proj
                pl.BlockSpec((vocab, d_model), lambda i: (0, 0)),   # emb table (VMEM)
            ],
            out_specs=pl.BlockSpec((tm, d_model), lambda i: (i, 0)),
        ),
        compiler_params=pltpu.CompilerParams(
            dimension_semantics=("parallel",)),   # independent M-tiles -> 2 TCs on v7x
    )(ids, sen, w_proj_t.astype(jnp.float32), t5_embeddings.astype(jnp.float32))

    return out[:nt].reshape(b, s, d_model)


def _reference(input_ids, senembeddings, w_proj_t, t5_embeddings, sen_id=SEN_ID):
    proj = jnp.einsum("bsd,dk->bsk", senembeddings.astype(jnp.float32),
                      w_proj_t.astype(jnp.float32))
    plot_ids = jnp.where(input_ids != sen_id, input_ids, 0)
    word = t5_embeddings[plot_ids]                    # == one_hot @ table
    return jnp.where(proj != 0.0, proj, word)


if __name__ == "__main__":
    key = jax.random.PRNGKey(0)
    k_ids, k_sen, k_w, k_emb = jax.random.split(key, 4)

    # token ids; mark two positions per row as <SEN>
    input_ids = jax.random.randint(k_ids, (B, S), 0, VOCAB, dtype=jnp.int32)
    input_ids = input_ids.at[:, 2].set(SEN_ID).at[:, 5].set(SEN_ID)

    # sentence embeddings: nonzero only at <SEN> positions (as in the dataset)
    sen_full = jax.random.normal(k_sen, (B, S, D_SEN), dtype=jnp.float32)
    sen_mask = (input_ids == SEN_ID)[:, :, None].astype(jnp.float32)
    senembeddings = sen_full * sen_mask

    # deterministic synthetic parameters
    w_proj_t = (jax.random.normal(k_w, (D_SEN, D_MODEL), dtype=jnp.float32)
                * 0.02)                      # Linear(768,512,bias=False).weight.T
    t5_embeddings = (jax.random.normal(k_emb, (VOCAB, D_MODEL),
                                       dtype=jnp.float32) * 0.02)  # shared.weight

    # tm=8 exercises a multi-step "parallel" grid at this toy size;
    # real workloads would use the default tm=128 (or 256).
    out = joint_embeddings(input_ids, senembeddings, w_proj_t, t5_embeddings, tm=8)
    out = jax.block_until_ready(out)

    ref = _reference(input_ids, senembeddings, w_proj_t, t5_embeddings)
    np.testing.assert_allclose(np.asarray(out), np.asarray(ref),
                               rtol=1e-3, atol=1e-4)

    print("KERNEL_OK")
</pallas_src>

<mosaic_0001>
module attributes {stable_mosaic.version = 11 : i64} {
  func.func @_joint_embed_kernel(%arg0: i32, %arg1: memref<8x1xi32, #tpu.memory_space<vmem>>, %arg2: memref<8x768xf32, #tpu.memory_space<vmem>>, %arg3: memref<768x512xf32, #tpu.memory_space<vmem>>, %arg4: memref<512x512xf32, #tpu.memory_space<vmem>>, %arg5: memref<8x512xf32, #tpu.memory_space<vmem>>) attributes {dimension_semantics = [#tpu.dimension_semantics<parallel>], iteration_bounds = array<i64: 2>, scalar_prefetch = 0 : i64, scratch_operands = 0 : i64, tpu.core_type = #tpu.core_type<tc>, window_params = [{transform_indices = @transform_0, window_bounds = array<i64: 8, 1>}, {transform_indices = @transform_1, window_bounds = array<i64: 8, 768>}, {pipeline_mode = #tpu.pipeline_mode<synchronous>, transform_indices = @transform_2, window_bounds = array<i64: 768, 512>}, {pipeline_mode = #tpu.pipeline_mode<synchronous>, transform_indices = @transform_3, window_bounds = array<i64: 512, 512>}, {transform_indices = @transform_4, window_bounds = array<i64: 8, 512>}]} {
    %c0 = arith.constant 0 : index
    %c0_0 = arith.constant 0 : index
    %0 = vector.load %arg2[%c0, %c0_0] : memref<8x768xf32, #tpu.memory_space<vmem>>, vector<8x768xf32>
    %c0_1 = arith.constant 0 : index
    %c0_2 = arith.constant 0 : index
    %1 = vector.load %arg3[%c0_1, %c0_2] : memref<768x512xf32, #tpu.memory_space<vmem>>, vector<768x512xf32>
    %cst = arith.constant dense<0.000000e+00> : vector<8x512xf32>
    %2 = tpu.matmul %0, %1, %cst {dimension_numbers = #tpu.dot_dimension_numbers<[1], [0], [0], [1], [0, 0, 1, 1], [], []>} : vector<8x768xf32>, vector<768x512xf32>, vector<8x512xf32> -> vector<8x512xf32>
    %c0_3 = arith.constant 0 : index
    %c0_4 = arith.constant 0 : index
    %3 = vector.load %arg1[%c0_3, %c0_4] : memref<8x1xi32, #tpu.memory_space<vmem>>, vector<8x1xi32>
    %c500_i32 = arith.constant 500 : i32
    %4 = vector.broadcast %c500_i32 : i32 to vector<8x1xi32>
    %5 = arith.cmpi ne, %3, %4 : vector<8x1xi32>
    %c0_i32 = arith.constant 0 : i32
    %6 = vector.broadcast %c0_i32 : i32 to vector<8x1xi32>
    %7 = arith.select %5, %3, %6 : vector<8x1xi1>, vector<8x1xi32>
    %8 = tpu.iota {dimensions = array<i32: 1>} : vector<8x512xi32>
    %9 = vector.broadcast %7 : vector<8x1xi32> to vector<8x512xi32>
    %10 = arith.cmpi eq, %8, %9 : vector<8x512xi32>
    %11 = arith.extui %10 : vector<8x512xi1> to vector<8x512xi32>
    %12 = arith.sitofp %11 : vector<8x512xi32> to vector<8x512xf32>
    %c0_5 = arith.constant 0 : index
    %c0_6 = arith.constant 0 : index
    %13 = vector.load %arg4[%c0_5, %c0_6] : memref<512x512xf32, #tpu.memory_space<vmem>>, vector<512x512xf32>
    %cst_7 = arith.constant dense<0.000000e+00> : vector<8x512xf32>
    %14 = tpu.matmul %12, %13, %cst_7 {dimension_numbers = #tpu.dot_dimension_numbers<[1], [0], [0], [1], [0, 0, 1, 1], [], []>} : vector<8x512xf32>, vector<512x512xf32>, vector<8x512xf32> -> vector<8x512xf32>
    %cst_8 = arith.constant 0.000000e+00 : f32
    %15 = vector.broadcast %cst_8 : f32 to vector<8x512xf32>
    %16 = arith.cmpf one, %2, %15 : vector<8x512xf32>
    %17 = arith.select %16, %2, %14 : vector<8x512xi1>, vector<8x512xf32>
    %c0_9 = arith.constant 0 : index
    %c0_10 = arith.constant 0 : index
    %18 = vector.load %arg5[%c0_9, %c0_10] : memref<8x512xf32, #tpu.memory_space<vmem>>, vector<8x512xf32>
    tpu.vector_store %arg5[%c0_9, %c0_10], %17 {strides = array<i32>} : memref<8x512xf32, #tpu.memory_space<vmem>>, vector<8x512xf32>,
    return
  }
  func.func @transform_0(%arg0: i32) -> (i32, i32) {
    %c0_i32 = arith.constant 0 : i32
    %c0_i32_0 = arith.constant 0 : i32
    return %arg0, %c0_i32 : i32, i32
  }
  func.func @transform_1(%arg0: i32) -> (i32, i32) {
    %c0_i32 = arith.constant 0 : i32
    %c0_i32_0 = arith.constant 0 : i32
    return %arg0, %c0_i32 : i32, i32
  }
  func.func @transform_2(%arg0: i32) -> (i32, i32) {
    %c0_i32 = arith.constant 0 : i32
    %c0_i32_0 = arith.constant 0 : i32
    %c0_i32_1 = arith.constant 0 : i32
    return %c0_i32, %c0_i32_0 : i32, i32
  }
  func.func @transform_3(%arg0: i32) -> (i32, i32) {
    %c0_i32 = arith.constant 0 : i32
    %c0_i32_0 = arith.constant 0 : i32
    %c0_i32_1 = arith.constant 0 : i32
    return %c0_i32, %c0_i32_0 : i32, i32
  }
  func.func @transform_4(%arg0: i32) -> (i32, i32) {
    %c0_i32 = arith.constant 0 : i32
    %c0_i32_0 = arith.constant 0 : i32
    return %arg0, %c0_i32 : i32, i32
  }
}

</mosaic_0001>

<llo_original>
// kernel: tpu_custom_call.1
$region0: #{tpu_custom_call.1}
  #allocation0 [shape = 'u32[]', space=smem, size = 0x4, offset = 0x4, fixed_abs, tag = 'smem constant byte address 0x4 - core index']
  #allocation1 [shape = 'u32[144,128]{1,0:T(1,128)}', space=vmem, size = 0x12000, scoped, tag = 'internal scratch']
  %s0 = inlined_call_operand.vmem [shape: s32[16,1], index: 0, kind: input, shape index: {}]
  %s1 = inlined_call_operand.hbm [shape: f32[16,768], index: 1, kind: input, shape index: {}]
  %s2 = inlined_call_operand.hbm [shape: f32[768,512], index: 2, kind: input, shape index: {}]
  %s3 = inlined_call_operand.hbm [shape: f32[512,512], index: 3, kind: input, shape index: {}]
  %s4 = inlined_call_operand.hbm [shape: f32[16,512], index: 4, kind: output, shape index: {}]
  %s5 = sld [smem:[#allocation0]]
  $region61: #{tpu_custom_call.1} parent=0
    _
  %s7 = ssub.s32 1, %s5
  %s8 = scalar_select 0, %s7, %s5
  $region1: #{tpu_custom_call.1} parent=0
    #allocation2 [shape = 'u8[49152]{0}', space=vmem, size = 0xc000, scoped, tag = 'input window, operand 1']
    #allocation3 [shape = 's32[2]{0}', space=sflag, size = 0x8, scoped, tag = 'scoped memory for tpu_custom_call.1']
    #allocation4 [shape = 's32[2]{0}', space=sflag, size = 0x8, scoped, tag = 'scoped memory for tpu_custom_call.1']
    #allocation5 [shape = 'u8[1572864]{0}', space=vmem, size = 0x180000, scoped, tag = 'input window, operand 2, single buffered']
    #allocation6 [shape = 's32[1]{0}', space=sflag, size = 0x4, scoped, tag = 'scoped memory for tpu_custom_call.1']
    #allocation7 [shape = 'u8[1048576]{0}', space=vmem, size = 0x100000, scoped, tag = 'input window, operand 3, single buffered']
    #allocation8 [shape = 'u8[32768]{0}', space=vmem, size = 0x8000, scoped, tag = 'output window, operand 0']
    %9 = vsyncpa [#allocation3], 0
    %s10 = scalar_lea.sflag [#allocation3], 1
    %11 = vsyncpa %s10, 0
    %12 = vsyncpa [#allocation6], 0
    %13 = vsyncpa [#allocation4], 0
    %s14 = scalar_lea.sflag [#allocation4], 1
    %15 = vsyncpa %s14, 0
    loop: start=0, step=1, limit=4
    $region2: #{tpu_custom_call.1} parent=1 // loop_pre_header
      _
    $region3: #{tpu_custom_call.1} parent=1 // loop_header
      %s17 = sphi 0, %s21
      %p18 = scmp.ge.s32.totalorder %s17, 4
      %s27 = sphi 0, %s29
      %s30 = sphi 0, %s27
      %s31 = sphi 0, %s30
      %s47 = sphi 0, %s31
      %s53 = sphi 0, %s55
      %s56 = sphi 0, %s53
      %s57 = sphi 0, %s56
      %s73 = sphi 0, %s57
      %s77 = sphi 0, %s77
      %s79 = sphi 0, %s77
      %s80 = sphi 0, %s79
      %s94 = sphi 0, %s80
      %s98 = sphi 0, %s98
      %s100 = sphi 0, %s98
      %s101 = sphi 0, %s100
      %s115 = sphi 0, %s101
      %s121 = sphi 0, %s123
      %s124 = sphi 0, %s121
      %s125 = sphi 0, %s124
      %s141 = sphi 0, %s125
    $region4: #{tpu_custom_call.1} parent=1 // loop_header_branch
      %20 = sbr.rel (%p18) target = $region8
    $region5: #{tpu_custom_call.1} parent=1 // loop_body
      %s22 = ssub.s32 %s17, 1
      %s23 = ssub.s32 %s17, 2
      %s24 = sadd.s32 %s17, 1
      %s25 = ssub.s32 %s17, %s24
      %p26 = scmp.eq.s32.totalorder %s25, 0
      %s28 = sadd.s32 %s27, 1
      %s29 = scalar_select %p26, %s27, %s28
      %p32 = pneg %p26
      %p33 = scmp.eq.s32.totalorder %s17, 1
      %p34 = por %p32, %p33
      %p35 = scmp.ne.s32.totalorder %s27, %s30
      %p36 = scmp.eq.s32.totalorder %s17, 0
      %p37 = por %p35, %p36
      %p38 = scmp.ne.s32.totalorder %s27, %s30
      %p39 = scmp.eq.s32.totalorder %s22, 1
      %p40 = por %p38, %p39
      %p41 = scmp.ne.s32.totalorder %s30, %s31
      %p42 = scmp.eq.s32.totalorder %s22, 0
      %p43 = por %p41, %p42
      %p44 = scmp.ne.s32.totalorder %s30, %s31
      %p45 = scmp.eq.s32.totalorder %s23, 1
      %p46 = por %p44, %p45
      %p48 = scmp.ne.s32.totalorder %s31, %s47
      %p49 = scmp.eq.s32.totalorder %s23, 0
      %p50 = por %p48, %p49
      %s51 = ssub.s32 %s17, %s24
      %p52 = scmp.eq.s32.totalorder %s51, 0
      %s54 = sadd.s32 %s53, 1
      %s55 = scalar_select %p52, %s53, %s54
      %p58 = pneg %p52
      %p59 = scmp.eq.s32.totalorder %s17, 1
      %p60 = por %p58, %p59
      %p61 = scmp.ne.s32.totalorder %s53, %s56
      %p62 = scmp.eq.s32.totalorder %s17, 0
      %p63 = por %p61, %p62
      %p64 = scmp.ne.s32.totalorder %s53, %s56
      %p65 = scmp.eq.s32.totalorder %s22, 1
      %p66 = por %p64, %p65
      %p67 = scmp.ne.s32.totalorder %s56, %s57
      %p68 = scmp.eq.s32.totalorder %s22, 0
      %p69 = por %p67, %p68
      %p70 = scmp.ne.s32.totalorder %s56, %s57
      %p71 = scmp.eq.s32.totalorder %s23, 1
      %p72 = por %p70, %p71
      %p74 = scmp.ne.s32.totalorder %s57, %s73
      %p75 = scmp.eq.s32.totalorder %s23, 0
      %p76 = por %p74, %p75
      %s78 = sadd.s32 %s77, 1
      %p81 = scmp.eq.s32.totalorder %s17, 1
      %p82 = scmp.ne.s32.totalorder %s77, %s79
      %p83 = scmp.eq.s32.totalorder %s17, 0
      %p84 = por %p82, %p83
      %p85 = scmp.ne.s32.totalorder %s77, %s79
      %p86 = scmp.eq.s32.totalorder %s22, 1
      %p87 = por %p85, %p86
      %p88 = scmp.ne.s32.totalorder %s79, %s80
      %p89 = scmp.eq.s32.totalorder %s22, 0
      %p90 = por %p88, %p89
      %p91 = scmp.ne.s32.totalorder %s79, %s80
      %p92 = scmp.eq.s32.totalorder %s23, 1
      %p93 = por %p91, %p92
      %p95 = scmp.ne.s32.totalorder %s80, %s94
      %p96 = scmp.eq.s32.totalorder %s23, 0
      %p97 = por %p95, %p96
      %s99 = sadd.s32 %s98, 1
      %p102 = scmp.eq.s32.totalorder %s17, 1
      %p103 = scmp.ne.s32.totalorder %s98, %s100
      %p104 = scmp.eq.s32.totalorder %s17, 0
      %p105 = por %p103, %p104
      %p106 = scmp.ne.s32.totalorder %s98, %s100
      %p107 = scmp.eq.s32.totalorder %s22, 1
      %p108 = por %p106, %p107
      %p109 = scmp.ne.s32.totalorder %s100, %s101
      %p110 = scmp.eq.s32.totalorder %s22, 0
      %p111 = por %p109, %p110
      %p112 = scmp.ne.s32.totalorder %s100, %s101
      %p113 = scmp.eq.s32.totalorder %s23, 1
      %p114 = por %p112, %p113
      %p116 = scmp.ne.s32.totalorder %s101, %s115
      %p117 = scmp.eq.s32.totalorder %s23, 0
      %p118 = por %p116, %p117
      %s119 = ssub.s32 %s17, %s24
      %p120 = scmp.eq.s32.totalorder %s119, 0
      %s122 = sadd.s32 %s121, 1
      %s123 = scalar_select %p120, %s121, %s122
      %p126 = pneg %p120
      %p127 = scmp.eq.s32.totalorder %s17, 1
      %p128 = por %p126, %p127
      %p129 = scmp.ne.s32.totalorder %s121, %s124
      %p130 = scmp.eq.s32.totalorder %s17, 0
      %p131 = por %p129, %p130
      %p132 = scmp.ne.s32.totalorder %s121, %s124
      %p133 = scmp.eq.s32.totalorder %s22, 1
      %p134 = por %p132, %p133
      %p135 = scmp.ne.s32.totalorder %s124, %s125
      %p136 = scmp.eq.s32.totalorder %s22, 0
      %p137 = por %p135, %p136
      %p138 = scmp.ne.s32.totalorder %s124, %s125
      %p139 = scmp.eq.s32.totalorder %s23, 1
      %p140 = por %p138, %p139
      %p142 = scmp.ne.s32.totalorder %s125, %s141
      %p143 = scmp.eq.s32.totalorder %s23, 0
      %p144 = por %p142, %p143
      %p145 = scmp.le.s32.totalorder 1, %s17
      %p146 = scmp.lt.s32.totalorder %s17, 3
      %p147 = pnand %p145, %p146
      %p148 = pneg %p147
      // Predicated region
      $region9: #{tpu_custom_call.1} parent=5 // pred_check
        _
      $region10: #{tpu_custom_call.1} parent=5 // pred_check_branch
        %150 = sbr.rel (%p147) target = $region12
      $region11: #{tpu_custom_call.1} parent=5 // pred_region
        %s151 = ssub.s32 %s17, 1
        // Predicated region
        $region13: #{tpu_custom_call.1} parent=11 // pred_check
          %p152 = pneg %p90
        $region14: #{tpu_custom_call.1} parent=11 // pred_check_branch
          %154 = sbr.rel (%p152) target = $region16
        $region15: #{tpu_custom_call.1} parent=11 // pred_region
          %s156 = ssub.s32 49152, 49152
          %157 = vsyncadd [#allocation6], %s156
          %s158 = sshll.u32 [#allocation5], 4
          %s159 = int_to_ptr.vmem [resolvable:$true] %s158
          %164 = dma.hbm_to_vmem [thread:$0]  %s2, 49152, %s159, [#allocation6], 512, 512, 32
        $region16: #{tpu_custom_call.1} parent=11 // pred_fallthru
          _
        // Predicated region
        $region17: #{tpu_custom_call.1} parent=11 // pred_check
          %p165 = pneg %p111
        $region18: #{tpu_custom_call.1} parent=11 // pred_check_branch
          %167 = sbr.rel (%p165) target = $region20
        $region19: #{tpu_custom_call.1} parent=11 // pred_region
          %s169 = ssub.s32 32768, 32768
          %170 = vsyncadd [#allocation6], %s169
          %s171 = sshll.u32 [#allocation7], 4
          %s172 = int_to_ptr.vmem [resolvable:$true] %s171
          %177 = dma.hbm_to_vmem [thread:$0]  %s3, 32768, %s172, [#allocation6], 512, 512, 32
        $region20: #{tpu_custom_call.1} parent=11 // pred_fallthru
          _
      $region12: #{tpu_custom_call.1} parent=5 // pred_fallthru
        _
      %p178 = scmp.lt.s32.totalorder %s17, 2
      // Predicated region
      $region21: #{tpu_custom_call.1} parent=5 // pred_check
        %p179 = pneg %p178
      $region22: #{tpu_custom_call.1} parent=5 // pred_check_branch
        %181 = sbr.rel (%p179) target = $region24
      $region23: #{tpu_custom_call.1} parent=5 // pred_region
        // Predicated region
        $region25: #{tpu_custom_call.1} parent=23 // pred_check
          %p182 = pneg %p37
        $region26: #{tpu_custom_call.1} parent=23 // pred_check_branch
          %184 = sbr.rel (%p182) target = $region28
        $region27: #{tpu_custom_call.1} parent=23 // pred_region
          %p185 = scmp.lt.s32.totalorder %s17, 1
          %s186 = scalar_select %p185, %s17, 1
          %s187 = smul.addr %s186, 8
          %s188 = scalar_lea.vmem %s0, %s187
        $region28: #{tpu_custom_call.1} parent=23 // pred_fallthru
          _
        // Predicated region
        $region29: #{tpu_custom_call.1} parent=23 // pred_check
          %p189 = pneg %p63
        $region30: #{tpu_custom_call.1} parent=23 // pred_check_branch
          %191 = sbr.rel (%p189) target = $region32
        $region31: #{tpu_custom_call.1} parent=23 // pred_region
          %s192 = sand.u32 %s53, 1
          %s193 = scalar_lea.sflag [#allocation3], %s192
          %s194 = sand.u32 %s53, 1
          %s195 = smul.addr %s194, 48
          %s196 = scalar_lea.vmem [#allocation2], %s195
          %s198 = ssub.s32 768, 768
          %199 = vsyncadd %s193, %s198
          %s200 = smul.addr %s17, 6
          %s201 = smul.addr %s200, 128
          %s202 = scalar_lea.hbm %s1, %s201
          %s204 = sshll.u32 %s196, 4
          %s205 = int_to_ptr.vmem [resolvable:$true] %s204
          %207 = dma.hbm_to_vmem [thread:$0]  %s202, 768, %s205, %s193
        $region32: #{tpu_custom_call.1} parent=23 // pred_fallthru
          _
      $region24: #{tpu_custom_call.1} parent=5 // pred_fallthru
        _
      %p208 = scmp.le.s32.totalorder 1, %s17
      %p209 = scmp.lt.s32.totalorder %s17, 3
      %p210 = pnand %p208, %p209
      %p211 = pneg %p210
      // Predicated region
      $region33: #{tpu_custom_call.1} parent=5 // pred_check
        _
      $region34: #{tpu_custom_call.1} parent=5 // pred_check_branch
        %213 = sbr.rel (%p210) target = $region36
      $region35: #{tpu_custom_call.1} parent=5 // pred_region
        %s214 = ssub.s32 %s17, 1
        %s215 = sand.u32 %s56, 1
        %s216 = scalar_lea.sflag [#allocation3], %s215
        %s217 = sand.u32 %s56, 1
        %s218 = smul.addr %s217, 48
        %s219 = scalar_lea.vmem [#allocation2], %s218
        // Predicated region
        $region37: #{tpu_custom_call.1} parent=35 // pred_check
          %p220 = pneg %p69
        $region38: #{tpu_custom_call.1} parent=35 // pred_check_branch
          %222 = sbr.rel (%p220) target = $region40
        $region39: #{tpu_custom_call.1} parent=35 // pred_region
          %223 = dma.done %s216, 768
        $region40: #{tpu_custom_call.1} parent=35 // pred_fallthru
          _
        // Predicated region
        $region41: #{tpu_custom_call.1} parent=35 // pred_check
          %p224 = pneg %p90
        $region42: #{tpu_custom_call.1} parent=35 // pred_check_branch
          %226 = sbr.rel (%p224) target = $region44
        $region43: #{tpu_custom_call.1} parent=35 // pred_region
          %227 = dma.done [#allocation6], 49152
        $region44: #{tpu_custom_call.1} parent=35 // pred_fallthru
          _
        // Predicated region
        $region45: #{tpu_custom_call.1} parent=35 // pred_check
          %p228 = pneg %p111
        $region46: #{tpu_custom_call.1} parent=35 // pred_check_branch
          %230 = sbr.rel (%p228) target = $region48
        $region47: #{tpu_custom_call.1} parent=35 // pred_region
          %231 = dma.done [#allocation6], 32768
        $region48: #{tpu_custom_call.1} parent=35 // pred_fallthru
          _
        %p232 = scmp.lt.s32.totalorder %s22, 1
        %s233 = scalar_select %p232, %s22, 1
        %s234 = smul.addr %s233, 8
        %s235 = scalar_lea.vmem %s0, %s234
        %p236 = pneg %p43
        %p237 = pneg %p40
        %s238 = sand.u32 %s56, 1
        %s239 = scalar_lea.sflag [#allocation3], %s238
        %s240 = sand.u32 %s56, 1
        %s241 = smul.addr %s240, 48
        %s242 = scalar_lea.vmem [#allocation2], %s241
        %p243 = pneg %p69
        %p244 = pneg %p66
        %p245 = pneg %p90
        %p246 = pneg %p87
        %p247 = pneg %p111
        %p248 = pneg %p108
        %p249 = pneg %p137
        %p250 = pneg %p134
        %s251 = sand.u32 %s124, 1
        %s252 = scalar_lea.sflag [#allocation4], %s251
        %s253 = sand.u32 %s124, 1
        %s254 = smul.addr %s253, 32
        %s255 = scalar_lea.vmem [#allocation8], %s254
        %p256 = scmp.lt.s32.totalorder %s22, 1
        %s257 = scalar_select %p256, %s22, 1
        %s258 = smul.addr %s257, 8
        %s259 = scalar_lea.vmem %s0, %s258
        %v260 = vld [vmem:[%s219] sm:$0xff]
        %v261 = vld [vmem:[%s219 + $0x8] sm:$0xff]
        %v262 = vld [vmem:[%s219 + $0x10] sm:$0xff]
        %v263 = vld [vmem:[%s219 + $0x18] sm:$0xff]
        %v264 = vld [vmem:[%s219 + $0x20] sm:$0xff]
        %v265 = vld [vmem:[%s219 + $0x28] sm:$0xff]
        %v266 = vld [vmem:[#allocation5] sm:$0xff]
        %v267 = vld [vmem:[#allocation5 + $0x8] sm:$0xff]
        %v268 = vld [vmem:[#allocation5 + $0x10] sm:$0xff]
        %v269 = vld [vmem:[#allocation5 + $0x18] sm:$0xff]
        %v270 = vld [vmem:[#allocation5 + $0x20] sm:$0xff]
        %v271 = vld [vmem:[#allocation5 + $0x28] sm:$0xff]
        %v272 = vld [vmem:[#allocation5 + $0x30] sm:$0xff]
        %v273 = vld [vmem:[#allocation5 + $0x38] sm:$0xff]
        %v274 = vld [vmem:[#allocation5 + $0x40] sm:$0xff]
        %v275 = vld [vmem:[#allocation5 + $0x48] sm:$0xff]
        %v276 = vld [vmem:[#allocation5 + $0x50] sm:$0xff]
        %v277 = vld [vmem:[#allocation5 + $0x58] sm:$0xff]
        %v278 = vld [vmem:[#allocation5 + $0x60] sm:$0xff]
        %v279 = vld [vmem:[#allocation5 + $0x68] sm:$0xff]
        %v280 = vld [vmem:[#allocation5 + $0x70] sm:$0xff]
        %v281 = vld [vmem:[#allocation5 + $0x78] sm:$0xff]
        %v282 = vld [vmem:[#allocation5 + $0x80] sm:$0xff]
        %v283 = vld [vmem:[#allocation5 + $0x88] sm:$0xff]
        %v284 = vld [vmem:[#allocation5 + $0x90] sm:$0xff]
        %v285 = vld [vmem:[#allocation5 + $0x98] sm:$0xff]
        %v286 = vld [vmem:[#allocation5 + $0xa0] sm:$0xff]
        %v287 = vld [vmem:[#allocation5 + $0xa8] sm:$0xff]
        %v288 = vld [vmem:[#allocation5 + $0xb0] sm:$0xff]
        %v289 = vld [vmem:[#allocation5 + $0xb8] sm:$0xff]
        %v290 = vld [vmem:[#allocation5 + $0xc0] sm:$0xff]
        %v291 = vld [vmem:[#allocation5 + $0xc8] sm:$0xff]
        %v292 = vld [vmem:[#allocation5 + $0xd0] sm:$0xff]
        %v293 = vld [vmem:[#allocation5 + $0xd8] sm:$0xff]
        %v294 = vld [vmem:[#allocation5 + $0xe0] sm:$0xff]
        %v295 = vld [vmem:[#allocation5 + $0xe8] sm:$0xff]
        %v296 = vld [vmem:[#allocation5 + $0xf0] sm:$0xff]
        %v297 = vld [vmem:[#allocation5 + $0xf8] sm:$0xff]
        %v298 = vld [vmem:[#allocation5 + $0x100] sm:$0xff]
        %v299 = vld [vmem:[#allocation5 + $0x108] sm:$0xff]
        %v300 = vld [vmem:[#allocation5 + $0x110] sm:$0xff]
        %v301 = vld [vmem:[#allocation5 + $0x118] sm:$0xff]
        %v302 = vld [vmem:[#allocation5 + $0x120] sm:$0xff]
        %v303 = vld [vmem:[#allocation5 + $0x128] sm:$0xff]
        %v304 = vld [vmem:[#allocation5 + $0x130] sm:$0xff]
        %v305 = vld [vmem:[#allocation5 + $0x138] sm:$0xff]
        %v306 = vld [vmem:[#allocation5 + $0x140] sm:$0xff]
        %v307 = vld [vmem:[#allocation5 + $0x148] sm:$0xff]
        %v308 = vld [vmem:[#allocation5 + $0x150] sm:$0xff]
        %v309 = vld [vmem:[#allocation5 + $0x158] sm:$0xff]
        %v310 = vld [vmem:[#allocation5 + $0x160] sm:$0xff]
        %v311 = vld [vmem:[#allocation5 + $0x168] sm:$0xff]
        %v312 = vld [vmem:[#allocation5 + $0x170] sm:$0xff]
        %v313 = vld [vmem:[#allocation5 + $0x178] sm:$0xff]
        %v314 = vld [vmem:[#allocation5 + $0x180] sm:$0xff]
        %v315 = vld [vmem:[#allocation5 + $0x188] sm:$0xff]
        %v316 = vld [vmem:[#allocation5 + $0x190] sm:$0xff]
        %v317 = vld [vmem:[#allocation5 + $0x198] sm:$0xff]
        %v318 = vld [vmem:[#allocation5 + $0x1a0] sm:$0xff]
        %v319 = vld [vmem:[#allocation5 + $0x1a8] sm:$0xff]
        %v320 = vld [vmem:[#allocation5 + $0x1b0] sm:$0xff]
        %v321 = vld [vmem:[#allocation5 + $0x1b8] sm:$0xff]
        %v322 = vld [vmem:[#allocation5 + $0x1c0] sm:$0xff]
        %v323 = vld [vmem:[#allocation5 + $0x1c8] sm:$0xff]
        %v324 = vld [vmem:[#allocation5 + $0x1d0] sm:$0xff]
        %v325 = vld [vmem:[#allocation5 + $0x1d8] sm:$0xff]
        %v326 = vld [vmem:[#allocation5 + $0x1e0] sm:$0xff]
        %v327 = vld [vmem:[#allocation5 + $0x1e8] sm:$0xff]
        %v328 = vld [vmem:[#allocation5 + $0x1f0] sm:$0xff]
        %v329 = vld [vmem:[#allocation5 + $0x1f8] sm:$0xff]
        %v330 = vld [vmem:[#allocation5 + $0x200] sm:$0xff]
        %v331 = vld [vmem:[#allocation5 + $0x208] sm:$0xff]
        %v332 = vld [vmem:[#allocation5 + $0x210] sm:$0xff]
        %v333 = vld [vmem:[#allocation5 + $0x218] sm:$0xff]
        %v334 = vld [vmem:[#allocation5 + $0x220] sm:$0xff]
        %v335 = vld [vmem:[#allocation5 + $0x228] sm:$0xff]
        %v336 = vld [vmem:[#allocation5 + $0x230] sm:$0xff]
        %v337 = vld [vmem:[#allocation5 + $0x238] sm:$0xff]
        %v338 = vld [vmem:[#allocation5 + $0x240] sm:$0xff]
        %v339 = vld [vmem:[#allocation5 + $0x248] sm:$0xff]
        %v340 = vld [vmem:[#allocation5 + $0x250] sm:$0xff]
        %v341 = vld [vmem:[#allocation5 + $0x258] sm:$0xff]
        %v342 = vld [vmem:[#allocation5 + $0x260] sm:$0xff]
        %v343 = vld [vmem:[#allocation5 + $0x268] sm:$0xff]
        %v344 = vld [vmem:[#allocation5 + $0x270] sm:$0xff]
        %v345 = vld [vmem:[#allocation5 + $0x278] sm:$0xff]
        %v346 = vld [vmem:[#allocation5 + $0x280] sm:$0xff]
        %v347 = vld [vmem:[#allocation5 + $0x288] sm:$0xff]
        %v348 = vld [vmem:[#allocation5 + $0x290] sm:$0xff]
        %v349 = vld [vmem:[#allocation5 + $0x298] sm:$0xff]
        %v350 = vld [vmem:[#allocation5 + $0x2a0] sm:$0xff]
        %v351 = vld [vmem:[#allocation5 + $0x2a8] sm:$0xff]
        %v352 = vld [vmem:[#allocation5 + $0x2b0] sm:$0xff]
        %v353 = vld [vmem:[#allocation5 + $0x2b8] sm:$0xff]
        %v354 = vld [vmem:[#allocation5 + $0x2c0] sm:$0xff]
        %v355 = vld [vmem:[#allocation5 + $0x2c8] sm:$0xff]
        %v356 = vld [vmem:[#allocation5 + $0x2d0] sm:$0xff]
        %v357 = vld [vmem:[#allocation5 + $0x2d8] sm:$0xff]
        %v358 = vld [vmem:[#allocation5 + $0x2e0] sm:$0xff]
        %v359 = vld [vmem:[#allocation5 + $0x2e8] sm:$0xff]
        %v360 = vld [vmem:[#allocation5 + $0x2f0] sm:$0xff]
        %v361 = vld [vmem:[#allocation5 + $0x2f8] sm:$0xff]
        %v362 = vld [vmem:[#allocation5 + $0x300] sm:$0xff]
        %v363 = vld [vmem:[#allocation5 + $0x308] sm:$0xff]
        %v364 = vld [vmem:[#allocation5 + $0x310] sm:$0xff]
        %v365 = vld [vmem:[#allocation5 + $0x318] sm:$0xff]
        %v366 = vld [vmem:[#allocation5 + $0x320] sm:$0xff]
        %v367 = vld [vmem:[#allocation5 + $0x328] sm:$0xff]
        %v368 = vld [vmem:[#allocation5 + $0x330] sm:$0xff]
        %v369 = vld [vmem:[#allocation5 + $0x338] sm:$0xff]
        %v370 = vld [vmem:[#allocation5 + $0x340] sm:$0xff]
        %v371 = vld [vmem:[#allocation5 + $0x348] sm:$0xff]
        %v372 = vld [vmem:[#allocation5 + $0x350] sm:$0xff]
        %v373 = vld [vmem:[#allocation5 + $0x358] sm:$0xff]
        %v374 = vld [vmem:[#allocation5 + $0x360] sm:$0xff]
        %v375 = vld [vmem:[#allocation5 + $0x368] sm:$0xff]
        %v376 = vld [vmem:[#allocation5 + $0x370] sm:$0xff]
        %v377 = vld [vmem:[#allocation5 + $0x378] sm:$0xff]
        %v378 = vld [vmem:[#allocation5 + $0x380] sm:$0xff]
        %v379 = vld [vmem:[#allocation5 + $0x388] sm:$0xff]
        %v380 = vld [vmem:[#allocation5 + $0x390] sm:$0xff]
        %v381 = vld [vmem:[#allocation5 + $0x398] sm:$0xff]
        %v382 = vld [vmem:[#allocation5 + $0x3a0] sm:$0xff]
        %v383 = vld [vmem:[#allocation5 + $0x3a8] sm:$0xff]
        %v384 = vld [vmem:[#allocation5 + $0x3b0] sm:$0xff]
        %v385 = vld [vmem:[#allocation5 + $0x3b8] sm:$0xff]
        %v386 = vld [vmem:[#allocation5 + $0x3c0] sm:$0xff]
        %v387 = vld [vmem:[#allocation5 + $0x3c8] sm:$0xff]
        %v388 = vld [vmem:[#allocation5 + $0x3d0] sm:$0xff]
        %v389 = vld [vmem:[#allocation5 + $0x3d8] sm:$0xff]
        %v390 = vld [vmem:[#allocation5 + $0x3e0] sm:$0xff]
        %v391 = vld [vmem:[#allocation5 + $0x3e8] sm:$0xff]
        %v392 = vld [vmem:[#allocation5 + $0x3f0] sm:$0xff]
        %v393 = vld [vmem:[#allocation5 + $0x3f8] sm:$0xff]
        %v394 = vld [vmem:[#allocation5 + $0x400] sm:$0xff]
        %v395 = vld [vmem:[#allocation5 + $0x408] sm:$0xff]
        %v396 = vld [vmem:[#allocation5 + $0x410] sm:$0xff]
        %v397 = vld [vmem:[#allocation5 + $0x418] sm:$0xff]
        %v398 = vld [vmem:[#allocation5 + $0x420] sm:$0xff]
        %v399 = vld [vmem:[#allocation5 + $0x428] sm:$0xff]
        %v400 = vld [vmem:[#allocation5 + $0x430] sm:$0xff]
        %v401 = vld [vmem:[#allocation5 + $0x438] sm:$0xff]
        %v402 = vld [vmem:[#allocation5 + $0x440] sm:$0xff]
        %v403 = vld [vmem:[#allocation5 + $0x448] sm:$0xff]
        %v404 = vld [vmem:[#allocation5 + $0x450] sm:$0xff]
        %v405 = vld [vmem:[#allocation5 + $0x458] sm:$0xff]
        %v406 = vld [vmem:[#allocation5 + $0x460] sm:$0xff]
        %v407 = vld [vmem:[#allocation5 + $0x468] sm:$0xff]
        %v408 = vld [vmem:[#allocation5 + $0x470] sm:$0xff]
        %v409 = vld [vmem:[#allocation5 + $0x478] sm:$0xff]
        %v410 = vld [vmem:[#allocation5 + $0x480] sm:$0xff]
        %v411 = vld [vmem:[#allocation5 + $0x488] sm:$0xff]
        %v412 = vld [vmem:[#allocation5 + $0x490] sm:$0xff]
        %v413 = vld [vmem:[#allocation5 + $0x498] sm:$0xff]
        %v414 = vld [vmem:[#allocation5 + $0x4a0] sm:$0xff]
        %v415 = vld [vmem:[#allocation5 + $0x4a8] sm:$0xff]
        %v416 = vld [vmem:[#allocation5 + $0x4b0] sm:$0xff]
        %v417 = vld [vmem:[#allocation5 + $0x4b8] sm:$0xff]
        %v418 = vld [vmem:[#allocation5 + $0x4c0] sm:$0xff]
        %v419 = vld [vmem:[#allocation5 + $0x4c8] sm:$0xff]
        %v420 = vld [vmem:[#allocation5 + $0x4d0] sm:$0xff]
        %v421 = vld [vmem:[#allocation5 + $0x4d8] sm:$0xff]
        %v422 = vld [vmem:[#allocation5 + $0x4e0] sm:$0xff]
        %v423 = vld [vmem:[#allocation5 + $0x4e8] sm:$0xff]
        %v424 = vld [vmem:[#allocation5 + $0x4f0] sm:$0xff]
        %v425 = vld [vmem:[#allocation5 + $0x4f8] sm:$0xff]
        %v426 = vld [vmem:[#allocation5 + $0x500] sm:$0xff]
        %v427 = vld [vmem:[#allocation5 + $0x508] sm:$0xff]
        %v428 = vld [vmem:[#allocation5 + $0x510] sm:$0xff]
        %v429 = vld [vmem:[#allocation5 + $0x518] sm:$0xff]
        %v430 = vld [vmem:[#allocation5 + $0x520] sm:$0xff]
        %v431 = vld [vmem:[#allocation5 + $0x528] sm:$0xff]
        %v432 = vld [vmem:[#allocation5 + $0x530] sm:$0xff]
        %v433 = vld [vmem:[#allocation5 + $0x538] sm:$0xff]
        %v434 = vld [vmem:[#allocation5 + $0x540] sm:$0xff]
        %v435 = vld [vmem:[#allocation5 + $0x548] sm:$0xff]
        %v436 = vld [vmem:[#allocation5 + $0x550] sm:$0xff]
        %v437 = vld [vmem:[#allocation5 + $0x558] sm:$0xff]
        %v438 = vld [vmem:[#allocation5 + $0x560] sm:$0xff]
        %v439 = vld [vmem:[#allocation5 + $0x568] sm:$0xff]
        %v440 = vld [vmem:[#allocation5 + $0x570] sm:$0xff]
        %v441 = vld [vmem:[#allocation5 + $0x578] sm:$0xff]
        %v442 = vld [vmem:[#allocation5 + $0x580] sm:$0xff]
        %v443 = vld [vmem:[#allocation5 + $0x588] sm:$0xff]
        %v444 = vld [vmem:[#allocation5 + $0x590] sm:$0xff]
        %v445 = vld [vmem:[#allocation5 + $0x598] sm:$0xff]
        %v446 = vld [vmem:[#allocation5 + $0x5a0] sm:$0xff]
        %v447 = vld [vmem:[#allocation5 + $0x5a8] sm:$0xff]
        %v448 = vld [vmem:[#allocation5 + $0x5b0] sm:$0xff]
        %v449 = vld [vmem:[#allocation5 + $0x5b8] sm:$0xff]
        %v450 = vld [vmem:[#allocation5 + $0x5c0] sm:$0xff]
        %v451 = vld [vmem:[#allocation5 + $0x5c8] sm:$0xff]
        %v452 = vld [vmem:[#allocation5 + $0x5d0] sm:$0xff]
        %v453 = vld [vmem:[#allocation5 + $0x5d8] sm:$0xff]
        %v454 = vld [vmem:[#allocation5 + $0x5e0] sm:$0xff]
        %v455 = vld [vmem:[#allocation5 + $0x5e8] sm:$0xff]
        %v456 = vld [vmem:[#allocation5 + $0x5f0] sm:$0xff]
        %v457 = vld [vmem:[#allocation5 + $0x5f8] sm:$0xff]
        %v458 = vld [vmem:[#allocation5 + $0x600] sm:$0xff]
        %v459 = vld [vmem:[#allocation5 + $0x608] sm:$0xff]
        %v460 = vld [vmem:[#allocation5 + $0x610] sm:$0xff]
        %v461 = vld [vmem:[#allocation5 + $0x618] sm:$0xff]
        %v462 = vld [vmem:[#allocation5 + $0x620] sm:$0xff]
        %v463 = vld [vmem:[#allocation5 + $0x628] sm:$0xff]
        %v464 = vld [vmem:[#allocation5 + $0x630] sm:$0xff]
        %v465 = vld [vmem:[#allocation5 + $0x638] sm:$0xff]
        %v466 = vld [vmem:[#allocation5 + $0x640] sm:$0xff]
        %v467 = vld [vmem:[#allocation5 + $0x648] sm:$0xff]
        %v468 = vld [vmem:[#allocation5 + $0x650] sm:$0xff]
        %v469 = vld [vmem:[#allocation5 + $0x658] sm:$0xff]
        %v470 = vld [vmem:[#allocation5 + $0x660] sm:$0xff]
        %v471 = vld [vmem:[#allocation5 + $0x668] sm:$0xff]
        %v472 = vld [vmem:[#allocation5 + $0x670] sm:$0xff]
        %v473 = vld [vmem:[#allocation5 + $0x678] sm:$0xff]
        %v474 = vld [vmem:[#allocation5 + $0x680] sm:$0xff]
        %v475 = vld [vmem:[#allocation5 + $0x688] sm:$0xff]
        %v476 = vld [vmem:[#allocation5 + $0x690] sm:$0xff]
        %v477 = vld [vmem:[#allocation5 + $0x698] sm:$0xff]
        %v478 = vld [vmem:[#allocation5 + $0x6a0] sm:$0xff]
        %v479 = vld [vmem:[#allocation5 + $0x6a8] sm:$0xff]
        %v480 = vld [vmem:[#allocation5 + $0x6b0] sm:$0xff]
        %v481 = vld [vmem:[#allocation5 + $0x6b8] sm:$0xff]
        %v482 = vld [vmem:[#allocation5 + $0x6c0] sm:$0xff]
        %v483 = vld [vmem:[#allocation5 + $0x6c8] sm:$0xff]
        %v484 = vld [vmem:[#allocation5 + $0x6d0] sm:$0xff]
        %v485 = vld [vmem:[#allocation5 + $0x6d8] sm:$0xff]
        %v486 = vld [vmem:[#allocation5 + $0x6e0] sm:$0xff]
        %v487 = vld [vmem:[#allocation5 + $0x6e8] sm:$0xff]
        %v488 = vld [vmem:[#allocation5 + $0x6f0] sm:$0xff]
        %v489 = vld [vmem:[#allocation5 + $0x6f8] sm:$0xff]
        %v490 = vld [vmem:[#allocation5 + $0x700] sm:$0xff]
        %v491 = vld [vmem:[#allocation5 + $0x708] sm:$0xff]
        %v492 = vld [vmem:[#allocation5 + $0x710] sm:$0xff]
        %v493 = vld [vmem:[#allocation5 + $0x718] sm:$0xff]
        %v494 = vld [vmem:[#allocation5 + $0x720] sm:$0xff]
        %v495 = vld [vmem:[#allocation5 + $0x728] sm:$0xff]
        %v496 = vld [vmem:[#allocation5 + $0x730] sm:$0xff]
        %v497 = vld [vmem:[#allocation5 + $0x738] sm:$0xff]
        %v498 = vld [vmem:[#allocation5 + $0x740] sm:$0xff]
        %v499 = vld [vmem:[#allocation5 + $0x748] sm:$0xff]
        %v500 = vld [vmem:[#allocation5 + $0x750] sm:$0xff]
        %v501 = vld [vmem:[#allocation5 + $0x758] sm:$0xff]
        %v502 = vld [vmem:[#allocation5 + $0x760] sm:$0xff]
        %v503 = vld [vmem:[#allocation5 + $0x768] sm:$0xff]
        %v504 = vld [vmem:[#allocation5 + $0x770] sm:$0xff]
        %v505 = vld [vmem:[#allocation5 + $0x778] sm:$0xff]
        %v506 = vld [vmem:[#allocation5 + $0x780] sm:$0xff]
        %v507 = vld [vmem:[#allocation5 + $0x788] sm:$0xff]
        %v508 = vld [vmem:[#allocation5 + $0x790] sm:$0xff]
        %v509 = vld [vmem:[#allocation5 + $0x798] sm:$0xff]
        %v510 = vld [vmem:[#allocation5 + $0x7a0] sm:$0xff]
        %v511 = vld [vmem:[#allocation5 + $0x7a8] sm:$0xff]
        %v512 = vld [vmem:[#allocation5 + $0x7b0] sm:$0xff]
        %v513 = vld [vmem:[#allocation5 + $0x7b8] sm:$0xff]
        %v514 = vld [vmem:[#allocation5 + $0x7c0] sm:$0xff]
        %v515 = vld [vmem:[#allocation5 + $0x7c8] sm:$0xff]
        %v516 = vld [vmem:[#allocation5 + $0x7d0] sm:$0xff]
        %v517 = vld [vmem:[#allocation5 + $0x7d8] sm:$0xff]
        %v518 = vld [vmem:[#allocation5 + $0x7e0] sm:$0xff]
        %v519 = vld [vmem:[#allocation5 + $0x7e8] sm:$0xff]
        %v520 = vld [vmem:[#allocation5 + $0x7f0] sm:$0xff]
        %v521 = vld [vmem:[#allocation5 + $0x7f8] sm:$0xff]
        %v522 = vld [vmem:[#allocation5 + $0x800] sm:$0xff]
        %v523 = vld [vmem:[#allocation5 + $0x808] sm:$0xff]
        %v524 = vld [vmem:[#allocation5 + $0x810] sm:$0xff]
        %v525 = vld [vmem:[#allocation5 + $0x818] sm:$0xff]
        %v526 = vld [vmem:[#allocation5 + $0x820] sm:$0xff]
        %v527 = vld [vmem:[#allocation5 + $0x828] sm:$0xff]
        %v528 = vld [vmem:[#allocation5 + $0x830] sm:$0xff]
        %v529 = vld [vmem:[#allocation5 + $0x838] sm:$0xff]
        %v530 = vld [vmem:[#allocation5 + $0x840] sm:$0xff]
        %v531 = vld [vmem:[#allocation5 + $0x848] sm:$0xff]
        %v532 = vld [vmem:[#allocation5 + $0x850] sm:$0xff]
        %v533 = vld [vmem:[#allocation5 + $0x858] sm:$0xff]
        %v534 = vld [vmem:[#allocation5 + $0x860] sm:$0xff]
        %v535 = vld [vmem:[#allocation5 + $0x868] sm:$0xff]
        %v536 = vld [vmem:[#allocation5 + $0x870] sm:$0xff]
        %v537 = vld [vmem:[#allocation5 + $0x878] sm:$0xff]
        %v538 = vld [vmem:[#allocation5 + $0x880] sm:$0xff]
        %v539 = vld [vmem:[#allocation5 + $0x888] sm:$0xff]
        %v540 = vld [vmem:[#allocation5 + $0x890] sm:$0xff]
        %v541 = vld [vmem:[#allocation5 + $0x898] sm:$0xff]
        %v542 = vld [vmem:[#allocation5 + $0x8a0] sm:$0xff]
        %v543 = vld [vmem:[#allocation5 + $0x8a8] sm:$0xff]
        %v544 = vld [vmem:[#allocation5 + $0x8b0] sm:$0xff]
        %v545 = vld [vmem:[#allocation5 + $0x8b8] sm:$0xff]
        %v546 = vld [vmem:[#allocation5 + $0x8c0] sm:$0xff]
        %v547 = vld [vmem:[#allocation5 + $0x8c8] sm:$0xff]
        %v548 = vld [vmem:[#allocation5 + $0x8d0] sm:$0xff]
        %v549 = vld [vmem:[#allocation5 + $0x8d8] sm:$0xff]
        %v550 = vld [vmem:[#allocation5 + $0x8e0] sm:$0xff]
        %v551 = vld [vmem:[#allocation5 + $0x8e8] sm:$0xff]
        %v552 = vld [vmem:[#allocation5 + $0x8f0] sm:$0xff]
        %v553 = vld [vmem:[#allocation5 + $0x8f8] sm:$0xff]
        %v554 = vld [vmem:[#allocation5 + $0x900] sm:$0xff]
        %v555 = vld [vmem:[#allocation5 + $0x908] sm:$0xff]
        %v556 = vld [vmem:[#allocation5 + $0x910] sm:$0xff]
        %v557 = vld [vmem:[#allocation5 + $0x918] sm:$0xff]
        %v558 = vld [vmem:[#allocation5 + $0x920] sm:$0xff]
        %v559 = vld [vmem:[#allocation5 + $0x928] sm:$0xff]
        %v560 = vld [vmem:[#allocation5 + $0x930] sm:$0xff]
        %v561 = vld [vmem:[#allocation5 + $0x938] sm:$0xff]
        %v562 = vld [vmem:[#allocation5 + $0x940] sm:$0xff]
        %v563 = vld [vmem:[#allocation5 + $0x948] sm:$0xff]
        %v564 = vld [vmem:[#allocation5 + $0x950] sm:$0xff]
        %v565 = vld [vmem:[#allocation5 + $0x958] sm:$0xff]
        %v566 = vld [vmem:[#allocation5 + $0x960] sm:$0xff]
        %v567 = vld [vmem:[#allocation5 + $0x968] sm:$0xff]
        %v568 = vld [vmem:[#allocation5 + $0x970] sm:$0xff]
        %v569 = vld [vmem:[#allocation5 + $0x978] sm:$0xff]
        %v570 = vld [vmem:[#allocation5 + $0x980] sm:$0xff]
        %v571 = vld [vmem:[#allocation5 + $0x988] sm:$0xff]
        %v572 = vld [vmem:[#allocation5 + $0x990] sm:$0xff]
        %v573 = vld [vmem:[#allocation5 + $0x998] sm:$0xff]
        %v574 = vld [vmem:[#allocation5 + $0x9a0] sm:$0xff]
        %v575 = vld [vmem:[#allocation5 + $0x9a8] sm:$0xff]
        %v576 = vld [vmem:[#allocation5 + $0x9b0] sm:$0xff]
        %v577 = vld [vmem:[#allocation5 + $0x9b8] sm:$0xff]
        %v578 = vld [vmem:[#allocation5 + $0x9c0] sm:$0xff]
        %v579 = vld [vmem:[#allocation5 + $0x9c8] sm:$0xff]
        %v580 = vld [vmem:[#allocation5 + $0x9d0] sm:$0xff]
        %v581 = vld [vmem:[#allocation5 + $0x9d8] sm:$0xff]
        %v582 = vld [vmem:[#allocation5 + $0x9e0] sm:$0xff]
        %v583 = vld [vmem:[#allocation5 + $0x9e8] sm:$0xff]
        %v584 = vld [vmem:[#allocation5 + $0x9f0] sm:$0xff]
        %v585 = vld [vmem:[#allocation5 + $0x9f8] sm:$0xff]
        %v586 = vld [vmem:[#allocation5 + $0xa00] sm:$0xff]
        %v587 = vld [vmem:[#allocation5 + $0xa08] sm:$0xff]
        %v588 = vld [vmem:[#allocation5 + $0xa10] sm:$0xff]
        %v589 = vld [vmem:[#allocation5 + $0xa18] sm:$0xff]
        %v590 = vld [vmem:[#allocation5 + $0xa20] sm:$0xff]
        %v591 = vld [vmem:[#allocation5 + $0xa28] sm:$0xff]
        %v592 = vld [vmem:[#allocation5 + $0xa30] sm:$0xff]
        %v593 = vld [vmem:[#allocation5 + $0xa38] sm:$0xff]
        %v594 = vld [vmem:[#allocation5 + $0xa40] sm:$0xff]
        %v595 = vld [vmem:[#allocation5 + $0xa48] sm:$0xff]
        %v596 = vld [vmem:[#allocation5 + $0xa50] sm:$0xff]
        %v597 = vld [vmem:[#allocation5 + $0xa58] sm:$0xff]
        %v598 = vld [vmem:[#allocation5 + $0xa60] sm:$0xff]
        %v599 = vld [vmem:[#allocation5 + $0xa68] sm:$0xff]
        %v600 = vld [vmem:[#allocation5 + $0xa70] sm:$0xff]
        %v601 = vld [vmem:[#allocation5 + $0xa78] sm:$0xff]
        %v602 = vld [vmem:[#allocation5 + $0xa80] sm:$0xff]
        %v603 = vld [vmem:[#allocation5 + $0xa88] sm:$0xff]
        %v604 = vld [vmem:[#allocation5 + $0xa90] sm:$0xff]
        %v605 = vld [vmem:[#allocation5 + $0xa98] sm:$0xff]
        %v606 = vld [vmem:[#allocation5 + $0xaa0] sm:$0xff]
        %v607 = vld [vmem:[#allocation5 + $0xaa8] sm:$0xff]
        %v608 = vld [vmem:[#allocation5 + $0xab0] sm:$0xff]
        %v609 = vld [vmem:[#allocation5 + $0xab8] sm:$0xff]
        %v610 = vld [vmem:[#allocation5 + $0xac0] sm:$0xff]
        %v611 = vld [vmem:[#allocation5 + $0xac8] sm:$0xff]
        %v612 = vld [vmem:[#allocation5 + $0xad0] sm:$0xff]
        %v613 = vld [vmem:[#allocation5 + $0xad8] sm:$0xff]
        %v614 = vld [vmem:[#allocation5 + $0xae0] sm:$0xff]
        %v615 = vld [vmem:[#allocation5 + $0xae8] sm:$0xff]
        %v616 = vld [vmem:[#allocation5 + $0xaf0] sm:$0xff]
        %v617 = vld [vmem:[#allocation5 + $0xaf8] sm:$0xff]
        %v618 = vld [vmem:[#allocation5 + $0xb00] sm:$0xff]
        %v619 = vld [vmem:[#allocation5 + $0xb08] sm:$0xff]
        %v620 = vld [vmem:[#allocation5 + $0xb10] sm:$0xff]
        %v621 = vld [vmem:[#allocation5 + $0xb18] sm:$0xff]
        %v622 = vld [vmem:[#allocation5 + $0xb20] sm:$0xff]
        %v623 = vld [vmem:[#allocation5 + $0xb28] sm:$0xff]
        %v624 = vld [vmem:[#allocation5 + $0xb30] sm:$0xff]
        %v625 = vld [vmem:[#allocation5 + $0xb38] sm:$0xff]
        %v626 = vld [vmem:[#allocation5 + $0xb40] sm:$0xff]
        %v627 = vld [vmem:[#allocation5 + $0xb48] sm:$0xff]
        %v628 = vld [vmem:[#allocation5 + $0xb50] sm:$0xff]
        %v629 = vld [vmem:[#allocation5 + $0xb58] sm:$0xff]
        %v630 = vld [vmem:[#allocation5 + $0xb60] sm:$0xff]
        %v631 = vld [vmem:[#allocation5 + $0xb68] sm:$0xff]
        %v632 = vld [vmem:[#allocation5 + $0xb70] sm:$0xff]
        %v633 = vld [vmem:[#allocation5 + $0xb78] sm:$0xff]
        %v634 = vld [vmem:[#allocation5 + $0xb80] sm:$0xff]
        %v635 = vld [vmem:[#allocation5 + $0xb88] sm:$0xff]
        %v636 = vld [vmem:[#allocation5 + $0xb90] sm:$0xff]
        %v637 = vld [vmem:[#allocation5 + $0xb98] sm:$0xff]
        %v638 = vld [vmem:[#allocation5 + $0xba0] sm:$0xff]
        %v639 = vld [vmem:[#allocation5 + $0xba8] sm:$0xff]
        %v640 = vld [vmem:[#allocation5 + $0xbb0] sm:$0xff]
        %v641 = vld [vmem:[#allocation5 + $0xbb8] sm:$0xff]
        %v642 = vld [vmem:[#allocation5 + $0xbc0] sm:$0xff]
        %v643 = vld [vmem:[#allocation5 + $0xbc8] sm:$0xff]
        %v644 = vld [vmem:[#allocation5 + $0xbd0] sm:$0xff]
        %v645 = vld [vmem:[#allocation5 + $0xbd8] sm:$0xff]
        %v646 = vld [vmem:[#allocation5 + $0xbe0] sm:$0xff]
        %v647 = vld [vmem:[#allocation5 + $0xbe8] sm:$0xff]
        %v648 = vld [vmem:[#allocation5 + $0xbf0] sm:$0xff]
        %v649 = vld [vmem:[#allocation5 + $0xbf8] sm:$0xff]
        %650 = vmatprep.subr.mxu0 %v267
        %651 = vmatpush1.msra.mxu0 %v266
        %652 = vmatprep.subr.mxu0 %v271
        %653 = vmatpush1.msra.mxu0 %v270
        %654 = vmatprep.subr.mxu0 %v275
        %655 = vmatpush1.msra.mxu0 %v274
        %656 = vmatprep.subr.mxu0 %v279
        %657 = vmatpush1.msra.mxu0 %v278
        %658 = vmatprep.subr.mxu0 %v283
        %659 = vmatpush1.msra.mxu0 %v282
        %660 = vmatprep.subr.mxu0 %v287
        %661 = vmatpush1.msra.mxu0 %v286
        %662 = vmatprep.subr.mxu0 %v291
        %663 = vmatpush1.msra.mxu0 %v290
        %664 = vmatprep.subr.mxu0 %v295
        %665 = vmatpush1.msra.mxu0 %v294
        %666 = vmatprep.subr.mxu0 %v299
        %667 = vmatpush1.msra.mxu0 %v298
        %668 = vmatprep.subr.mxu0 %v303
        %669 = vmatpush1.msra.mxu0 %v302
        %670 = vmatprep.subr.mxu0 %v307
        %671 = vmatpush1.msra.mxu0 %v306
        %672 = vmatprep.subr.mxu0 %v311
        %673 = vmatpush1.msra.mxu0 %v310
        %674 = vmatprep.subr.mxu0 %v315
        %675 = vmatpush1.msra.mxu0 %v314
        %676 = vmatprep.subr.mxu0 %v319
        %677 = vmatpush1.msra.mxu0 %v318
        %678 = vmatprep.subr.mxu0 %v323
        %679 = vmatpush1.msra.mxu0 %v322
        %680 = vmatprep.subr.mxu0 %v327
        %681 = vmatpush1.msra.mxu0 %v326
        %682 = vmatprep.subr.mxu0 %v331
        %683 = vmatpush1.msra.mxu0 %v330
        %684 = vmatprep.subr.mxu0 %v335
        %685 = vmatpush1.msra.mxu0 %v334
        %686 = vmatprep.subr.mxu0 %v339
        %687 = vmatpush1.msra.mxu0 %v338
        %688 = vmatprep.subr.mxu0 %v343
        %689 = vmatpush1.msra.mxu0 %v342
        %690 = vmatprep.subr.mxu0 %v347
        %691 = vmatpush1.msra.mxu0 %v346
        %692 = vmatprep.subr.mxu0 %v351
        %693 = vmatpush1.msra.mxu0 %v350
        %694 = vmatprep.subr.mxu0 %v355
        %695 = vmatpush1.msra.mxu0 %v354
        %696 = vmatprep.subr.mxu0 %v359
        %697 = vmatpush1.msra.mxu0 %v358
        %698 = vmatprep.subr.mxu0 %v363
        %699 = vmatpush1.msra.mxu0 %v362
        %700 = vmatprep.subr.mxu0 %v367
        %701 = vmatpush1.msra.mxu0 %v366
        %702 = vmatprep.subr.mxu0 %v371
        %703 = vmatpush1.msra.mxu0 %v370
        %704 = vmatprep.subr.mxu0 %v375
        %705 = vmatpush1.msra.mxu0 %v374
        %706 = vmatprep.subr.mxu0 %v379
        %707 = vmatpush1.msra.mxu0 %v378
        %708 = vmatprep.subr.mxu0 %v383
        %709 = vmatpush1.msra.mxu0 %v382
        %710 = vmatprep.subr.mxu0 %v387
        %711 = vmatpush1.msra.mxu0 %v386
        %712 = vmatprep.subr.mxu0 %v391
        %713 = vmatpush1.msra.mxu0 %v390
        %714 = vmatprep.mubr.f32.mxu0 %v261
        %715 = vmatmul.mubr.f32.gmra.mrb[0].mxu0 %v260
        %v716 = vpop.f32.mrb[0].mxu0
        %v717 = vadd.f32 0.0, %v716
        %v718 = vpop.f32.mrb[0].mxu0
        %v719 = vadd.f32 0.0, %v718
        %720 = vdwg.mxu0
        %721 = vmatprep.subr.mxu0 %v395
        %722 = vmatpush1.msra.mxu0 %v394
        %723 = vmatprep.subr.mxu0 %v399
        %724 = vmatpush1.msra.mxu0 %v398
        %725 = vmatprep.subr.mxu0 %v403
        %726 = vmatpush1.msra.mxu0 %v402
        %727 = vmatprep.subr.mxu0 %v407
        %728 = vmatpush1.msra.mxu0 %v406
        %729 = vmatprep.subr.mxu0 %v411
        %730 = vmatpush1.msra.mxu0 %v410
        %731 = vmatprep.subr.mxu0 %v415
        %732 = vmatpush1.msra.mxu0 %v414
        %733 = vmatprep.subr.mxu0 %v419
        %734 = vmatpush1.msra.mxu0 %v418
        %735 = vmatprep.subr.mxu0 %v423
        %736 = vmatpush1.msra.mxu0 %v422
        %737 = vmatprep.subr.mxu0 %v427
        %738 = vmatpush1.msra.mxu0 %v426
        %739 = vmatprep.subr.mxu0 %v431
        %740 = vmatpush1.msra.mxu0 %v430
        %741 = vmatprep.subr.mxu0 %v435
        %742 = vmatpush1.msra.mxu0 %v434
        %743 = vmatprep.subr.mxu0 %v439
        %744 = vmatpush1.msra.mxu0 %v438
        %745 = vmatprep.subr.mxu0 %v443
        %746 = vmatpush1.msra.mxu0 %v442
        %747 = vmatprep.subr.mxu0 %v447
        %748 = vmatpush1.msra.mxu0 %v446
        %749 = vmatprep.subr.mxu0 %v451
        %750 = vmatpush1.msra.mxu0 %v450
        %751 = vmatprep.subr.mxu0 %v455
        %752 = vmatpush1.msra.mxu0 %v454
        %753 = vmatprep.subr.mxu0 %v459
        %754 = vmatpush1.msra.mxu0 %v458
        %755 = vmatprep.subr.mxu0 %v463
        %756 = vmatpush1.msra.mxu0 %v462
        %757 = vmatprep.subr.mxu0 %v467
        %758 = vmatpush1.msra.mxu0 %v466
        %759 = vmatprep.subr.mxu0 %v471
        %760 = vmatpush1.msra.mxu0 %v470
        %761 = vmatprep.subr.mxu0 %v475
        %762 = vmatpush1.msra.mxu0 %v474
        %763 = vmatprep.subr.mxu0 %v479
        %764 = vmatpush1.msra.mxu0 %v478
        %765 = vmatprep.subr.mxu0 %v483
        %766 = vmatpush1.msra.mxu0 %v482
        %767 = vmatprep.subr.mxu0 %v487
        %768 = vmatpush1.msra.mxu0 %v486
        %769 = vmatprep.subr.mxu0 %v491
        %770 = vmatpush1.msra.mxu0 %v490
        %771 = vmatprep.subr.mxu0 %v495
        %772 = vmatpush1.msra.mxu0 %v494
        %773 = vmatprep.subr.mxu0 %v499
        %774 = vmatpush1.msra.mxu0 %v498
        %775 = vmatprep.subr.mxu0 %v503
        %776 = vmatpush1.msra.mxu0 %v502
        %777 = vmatprep.subr.mxu0 %v507
        %778 = vmatpush1.msra.mxu0 %v506
        %779 = vmatprep.subr.mxu0 %v511
        %780 = vmatpush1.msra.mxu0 %v510
        %781 = vmatprep.subr.mxu0 %v515
        %782 = vmatpush1.msra.mxu0 %v514
        %783 = vmatprep.subr.mxu0 %v519
        %784 = vmatpush1.msra.mxu0 %v518
        %785 = vmatprep.mubr.f32.mxu0 %v263
        %786 = vmatmul.mubr.f32.gmra.mrb[0].mxu0 %v262
        %v787 = vpop.f32.mrb[0].mxu0
        %v788 = vadd.f32 %v717, %v787
        %v789 = vpop.f32.mrb[0].mxu0
        %v790 = vadd.f32 %v719, %v789
        %791 = vdwg.mxu0
        %792 = vmatprep.subr.mxu0 %v523
        %793 = vmatpush1.msra.mxu0 %v522
        %794 = vmatprep.subr.mxu0 %v527
        %795 = vmatpush1.msra.mxu0 %v526
        %796 = vmatprep.subr.mxu0 %v531
        %797 = vmatpush1.msra.mxu0 %v530
        %798 = vmatprep.subr.mxu0 %v535
        %799 = vmatpush1.msra.mxu0 %v534
        %800 = vmatprep.subr.mxu0 %v539
        %801 = vmatpush1.msra.mxu0 %v538
        %802 = vmatprep.subr.mxu0 %v543
        %803 = vmatpush1.msra.mxu0 %v542
        %804 = vmatprep.subr.mxu0 %v547
        %805 = vmatpush1.msra.mxu0 %v546
        %806 = vmatprep.subr.mxu0 %v551
        %807 = vmatpush1.msra.mxu0 %v550
        %808 = vmatprep.subr.mxu0 %v555
        %809 = vmatpush1.msra.mxu0 %v554
        %810 = vmatprep.subr.mxu0 %v559
        %811 = vmatpush1.msra.mxu0 %v558
        %812 = vmatprep.subr.mxu0 %v563
        %813 = vmatpush1.msra.mxu0 %v562
        %814 = vmatprep.subr.mxu0 %v567
        %815 = vmatpush1.msra.mxu0 %v566
        %816 = vmatprep.subr.mxu0 %v571
        %817 = vmatpush1.msra.mxu0 %v570
        %818 = vmatprep.subr.mxu0 %v575
        %819 = vmatpush1.msra.mxu0 %v574
        %820 = vmatprep.subr.mxu0 %v579
        %821 = vmatpush1.msra.mxu0 %v578
        %822 = vmatprep.subr.mxu0 %v583
        %823 = vmatpush1.msra.mxu0 %v582
        %824 = vmatprep.subr.mxu0 %v587
        %825 = vmatpush1.msra.mxu0 %v586
        %826 = vmatprep.subr.mxu0 %v591
        %827 = vmatpush1.msra.mxu0 %v590
        %828 = vmatprep.subr.mxu0 %v595
        %829 = vmatpush1.msra.mxu0 %v594
        %830 = vmatprep.subr.mxu0 %v599
        %831 = vmatpush1.msra.mxu0 %v598
        %832 = vmatprep.subr.mxu0 %v603
        %833 = vmatpush1.msra.mxu0 %v602
        %834 = vmatprep.subr.mxu0 %v607
        %835 = vmatpush1.msra.mxu0 %v606
        %836 = vmatprep.subr.mxu0 %v611
        %837 = vmatpush1.msra.mxu0 %v610
        %838 = vmatprep.subr.mxu0 %v615
        %839 = vmatpush1.msra.mxu0 %v614
        %840 = vmatprep.subr.mxu0 %v619
        %841 = vmatpush1.msra.mxu0 %v618
        %842 = vmatprep.subr.mxu0 %v623
        %843 = vmatpush1.msra.mxu0 %v622
        %844 = vmatprep.subr.mxu0 %v627
        %845 = vmatpush1.msra.mxu0 %v626
        %846 = vmatprep.subr.mxu0 %v631
        %847 = vmatpush1.msra.mxu0 %v630
        %848 = vmatprep.subr.mxu0 %v635
        %849 = vmatpush1.msra.mxu0 %v634
        %850 = vmatprep.subr.mxu0 %v639
        %851 = vmatpush1.msra.mxu0 %v638
        %852 = vmatprep.subr.mxu0 %v643
        %853 = vmatpush1.msra.mxu0 %v642
        %854 = vmatprep.subr.mxu0 %v647
        %855 = vmatpush1.msra.mxu0 %v646
        %856 = vmatprep.mubr.f32.mxu0 %v265
        %857 = vmatmul.mubr.f32.gmra.mrb[0].mxu0 %v264
        %v858 = vpop.f32.mrb[0].mxu0
        %v859 = vadd.f32 %v788, %v858
        %v860 = vpop.f32.mrb[0].mxu0
        %v861 = vadd.f32 %v790, %v860
        %862 = vdwg.mxu0
        %863 = vmatprep.subr.mxu0 %v269
        %864 = vmatpush1.msra.mxu0 %v268
        %865 = vmatprep.subr.mxu0 %v273
        %866 = vmatpush1.msra.mxu0 %v272
        %867 = vmatprep.subr.mxu0 %v277
        %868 = vmatpush1.msra.mxu0 %v276
        %869 = vmatprep.subr.mxu0 %v281
        %870 = vmatpush1.msra.mxu0 %v280
        %871 = vmatprep.subr.mxu0 %v285
        %872 = vmatpush1.msra.mxu0 %v284
        %873 = vmatprep.subr.mxu0 %v289
        %874 = vmatpush1.msra.mxu0 %v288
        %875 = vmatprep.subr.mxu0 %v293
        %876 = vmatpush1.msra.mxu0 %v292
        %877 = vmatprep.subr.mxu0 %v297
        %878 = vmatpush1.msra.mxu0 %v296
        %879 = vmatprep.subr.mxu0 %v301
        %880 = vmatpush1.msra.mxu0 %v300
        %881 = vmatprep.subr.mxu0 %v305
        %882 = vmatpush1.msra.mxu0 %v304
        %883 = vmatprep.subr.mxu0 %v309
        %884 = vmatpush1.msra.mxu0 %v308
        %885 = vmatprep.subr.mxu0 %v313
        %886 = vmatpush1.msra.mxu0 %v312
        %887 = vmatprep.subr.mxu0 %v317
        %888 = vmatpush1.msra.mxu0 %v316
        %889 = vmatprep.subr.mxu0 %v321
        %890 = vmatpush1.msra.mxu0 %v320
        %891 = vmatprep.subr.mxu0 %v325
        %892 = vmatpush1.msra.mxu0 %v324
        %893 = vmatprep.subr.mxu0 %v329
        %894 = vmatpush1.msra.mxu0 %v328
        %895 = vmatprep.subr.mxu0 %v333
        %896 = vmatpush1.msra.mxu0 %v332
        %897 = vmatprep.subr.mxu0 %v337
        %898 = vmatpush1.msra.mxu0 %v336
        %899 = vmatprep.subr.mxu0 %v341
        %900 = vmatpush1.msra.mxu0 %v340
        %901 = vmatprep.subr.mxu0 %v345
        %902 = vmatpush1.msra.mxu0 %v344
        %903 = vmatprep.subr.mxu0 %v349
        %904 = vmatpush1.msra.mxu0 %v348
        %905 = vmatprep.subr.mxu0 %v353
        %906 = vmatpush1.msra.mxu0 %v352
        %907 = vmatprep.subr.mxu0 %v357
        %908 = vmatpush1.msra.mxu0 %v356
        %909 = vmatprep.subr.mxu0 %v361
        %910 = vmatpush1.msra.mxu0 %v360
        %911 = vmatprep.subr.mxu0 %v365
        %912 = vmatpush1.msra.mxu0 %v364
        %913 = vmatprep.subr.mxu0 %v369
        %914 = vmatpush1.msra.mxu0 %v368
        %915 = vmatprep.subr.mxu0 %v373
        %916 = vmatpush1.msra.mxu0 %v372
        %917 = vmatprep.subr.mxu0 %v377
        %918 = vmatpush1.msra.mxu0 %v376
        %919 = vmatprep.subr.mxu0 %v381
        %920 = vmatpush1.msra.mxu0 %v380
        %921 = vmatprep.subr.mxu0 %v385
        %922 = vmatpush1.msra.mxu0 %v384
        %923 = vmatprep.subr.mxu0 %v389
        %924 = vmatpush1.msra.mxu0 %v388
        %925 = vmatprep.subr.mxu0 %v393
        %926 = vmatpush1.msra.mxu0 %v392
        %927 = vmatprep.mubr.f32.mxu0 %v261
        %928 = vmatmul.mubr.f32.gmra.mrb[0].mxu0 %v260
        %v929 = vpop.f32.mrb[0].mxu0
        %v930 = vadd.f32 0.0, %v929
        %v931 = vpop.f32.mrb[0].mxu0
        %v932 = vadd.f32 0.0, %v931
        %933 = vdwg.mxu0
        %934 = vmatprep.subr.mxu0 %v397
        %935 = vmatpush1.msra.mxu0 %v396
        %936 = vmatprep.subr.mxu0 %v401
        %937 = vmatpush1.msra.mxu0 %v400
        %938 = vmatprep.subr.mxu0 %v405
        %939 = vmatpush1.msra.mxu0 %v404
        %940 = vmatprep.subr.mxu0 %v409
        %941 = vmatpush1.msra.mxu0 %v408
        %942 = vmatprep.subr.mxu0 %v413
        %943 = vmatpush1.msra.mxu0 %v412
        %944 = vmatprep.subr.mxu0 %v417
        %945 = vmatpush1.msra.mxu0 %v416
        %946 = vmatprep.subr.mxu0 %v421
        %947 = vmatpush1.msra.mxu0 %v420
        %948 = vmatprep.subr.mxu0 %v425
        %949 = vmatpush1.msra.mxu0 %v424
        %950 = vmatprep.subr.mxu0 %v429
        %951 = vmatpush1.msra.mxu0 %v428
        %952 = vmatprep.subr.mxu0 %v433
        %953 = vmatpush1.msra.mxu0 %v432
        %954 = vmatprep.subr.mxu0 %v437
        %955 = vmatpush1.msra.mxu0 %v436
        %956 = vmatprep.subr.mxu0 %v441
        %957 = vmatpush1.msra.mxu0 %v440
        %958 = vmatprep.subr.mxu0 %v445
        %959 = vmatpush1.msra.mxu0 %v444
        %960 = vmatprep.subr.mxu0 %v449
        %961 = vmatpush1.msra.mxu0 %v448
        %962 = vmatprep.subr.mxu0 %v453
        %963 = vmatpush1.msra.mxu0 %v452
        %964 = vmatprep.subr.mxu0 %v457
        %965 = vmatpush1.msra.mxu0 %v456
        %966 = vmatprep.subr.mxu0 %v461
        %967 = vmatpush1.msra.mxu0 %v460
        %968 = vmatprep.subr.mxu0 %v465
        %969 = vmatpush1.msra.mxu0 %v464
        %970 = vmatprep.subr.mxu0 %v469
        %971 = vmatpush1.msra.mxu0 %v468
        %972 = vmatprep.subr.mxu0 %v473
        %973 = vmatpush1.msra.mxu0 %v472
        %974 = vmatprep.subr.mxu0 %v477
        %975 = vmatpush1.msra.mxu0 %v476
        %976 = vmatprep.subr.mxu0 %v481
        %977 = vmatpush1.msra.mxu0 %v480
        %978 = vmatprep.subr.mxu0 %v485
        %979 = vmatpush1.msra.mxu0 %v484
        %980 = vmatprep.subr.mxu0 %v489
        %981 = vmatpush1.msra.mxu0 %v488
        %982 = vmatprep.subr.mxu0 %v493
        %983 = vmatpush1.msra.mxu0 %v492
        %984 = vmatprep.subr.mxu0 %v497
        %985 = vmatpush1.msra.mxu0 %v496
        %986 = vmatprep.subr.mxu0 %v501
        %987 = vmatpush1.msra.mxu0 %v500
        %988 = vmatprep.subr.mxu0 %v505
        %989 = vmatpush1.msra.mxu0 %v504
        %990 = vmatprep.subr.mxu0 %v509
        %991 = vmatpush1.msra.mxu0 %v508
        %992 = vmatprep.subr.mxu0 %v513
        %993 = vmatpush1.msra.mxu0 %v512
        %994 = vmatprep.subr.mxu0 %v517
        %995 = vmatpush1.msra.mxu0 %v516
        %996 = vmatprep.subr.mxu0 %v521
        %997 = vmatpush1.msra.mxu0 %v520
        %998 = vmatprep.mubr.f32.mxu0 %v263
        %999 = vmatmul.mubr.f32.gmra.mrb[0].mxu0 %v262
        %v1000 = vpop.f32.mrb[0].mxu0
        %v1001 = vadd.f32 %v930, %v1000
        %v1002 = vpop.f32.mrb[0].mxu0
        %v1003 = vadd.f32 %v932, %v1002
        %1004 = vdwg.mxu0
        %1005 = vmatprep.subr.mxu0 %v525
        %1006 = vmatpush1.msra.mxu0 %v524
        %1007 = vmatprep.subr.mxu0 %v529
        %1008 = vmatpush1.msra.mxu0 %v528
        %1009 = vmatprep.subr.mxu0 %v533
        %1010 = vmatpush1.msra.mxu0 %v532
        %1011 = vmatprep.subr.mxu0 %v537
        %1012 = vmatpush1.msra.mxu0 %v536
        %1013 = vmatprep.subr.mxu0 %v541
        %1014 = vmatpush1.msra.mxu0 %v540
        %1015 = vmatprep.subr.mxu0 %v545
        %1016 = vmatpush1.msra.mxu0 %v544
        %1017 = vmatprep.subr.mxu0 %v549
        %1018 = vmatpush1.msra.mxu0 %v548
        %1019 = vmatprep.subr.mxu0 %v553
        %1020 = vmatpush1.msra.mxu0 %v552
        %1021 = vmatprep.subr.mxu0 %v557
        %1022 = vmatpush1.msra.mxu0 %v556
        %1023 = vmatprep.subr.mxu0 %v561
        %1024 = vmatpush1.msra.mxu0 %v560
        %1025 = vmatprep.subr.mxu0 %v565
        %1026 = vmatpush1.msra.mxu0 %v564
        %1027 = vmatprep.subr.mxu0 %v569
        %1028 = vmatpush1.msra.mxu0 %v568
        %1029 = vmatprep.subr.mxu0 %v573
        %1030 = vmatpush1.msra.mxu0 %v572
        %1031 = vmatprep.subr.mxu0 %v577
        %1032 = vmatpush1.msra.mxu0 %v576
        %1033 = vmatprep.subr.mxu0 %v581
        %1034 = vmatpush1.msra.mxu0 %v580
        %1035 = vmatprep.subr.mxu0 %v585
        %1036 = vmatpush1.msra.mxu0 %v584
        %1037 = vmatprep.subr.mxu0 %v589
        %1038 = vmatpush1.msra.mxu0 %v588
        %1039 = vmatprep.subr.mxu0 %v593
        %1040 = vmatpush1.msra.mxu0 %v592
        %1041 = vmatprep.subr.mxu0 %v597
        %1042 = vmatpush1.msra.mxu0 %v596
        %1043 = vmatprep.subr.mxu0 %v601
        %1044 = vmatpush1.msra.mxu0 %v600
        %1045 = vmatprep.subr.mxu0 %v605
        %1046 = vmatpush1.msra.mxu0 %v604
        %1047 = vmatprep.subr.mxu0 %v609
        %1048 = vmatpush1.msra.mxu0 %v608
        %1049 = vmatprep.subr.mxu0 %v613
        %1050 = vmatpush1.msra.mxu0 %v612
        %1051 = vmatprep.subr.mxu0 %v617
        %1052 = vmatpush1.msra.mxu0 %v616
        %1053 = vmatprep.subr.mxu0 %v621
        %1054 = vmatpush1.msra.mxu0 %v620
        %1055 = vmatprep.subr.mxu0 %v625
        %1056 = vmatpush1.msra.mxu0 %v624
        %1057 = vmatprep.subr.mxu0 %v629
        %1058 = vmatpush1.msra.mxu0 %v628
        %1059 = vmatprep.subr.mxu0 %v633
        %1060 = vmatpush1.msra.mxu0 %v632
        %1061 = vmatprep.subr.mxu0 %v637
        %1062 = vmatpush1.msra.mxu0 %v636
        %1063 = vmatprep.subr.mxu0 %v641
        %1064 = vmatpush1.msra.mxu0 %v640
        %1065 = vmatprep.subr.mxu0 %v645
        %1066 = vmatpush1.msra.mxu0 %v644
        %1067 = vmatprep.subr.mxu0 %v649
        %1068 = vmatpush1.msra.mxu0 %v648
        %1069 = vmatprep.mubr.f32.mxu0 %v265
        %1070 = vmatmul.mubr.f32.gmra.mrb[0].mxu0 %v264
        %v1071 = vpop.f32.mrb[0].mxu0
        %v1072 = vadd.f32 %v1001, %v1071
        %v1073 = vpop.f32.mrb[0].mxu0
        %v1074 = vadd.f32 %v1003, %v1073
        %1075 = vdwg.mxu0
        %v1076 = vld [vmem:[%s259] sm:$0xff]
        %vm1077 = vcmp.ne.s32.totalorder %v1076, 500
        %v1078 = vsel %vm1077, %v1076, 0
        %v1079 = vlaneseq
        %v1080 = vand.u32 %v1079, 127
        %v1081 = vadd.s32 %v1080, 128
        %v1082 = vadd.s32 %v1080, 256
        %v1083 = vadd.s32 %v1080, 384
        %1084 = vset.pattern.permute.xlu0 0
        %1085 = vperm.xlu0 %1084, %v1078
        %v1086 = vpop.permute.xlu0 %1085
        %vm1087 = vcmp.eq.s32.totalorder %v1080, %v1086
        %vm1088 = vcmp.eq.s32.totalorder %v1081, %v1086
        %vm1089 = vcmp.eq.s32.totalorder %v1082, %v1086
        %vm1090 = vcmp.eq.s32.totalorder %v1083, %v1086
        %v1091 = vsel %vm1087, 1, 0
        %v1092 = vsel %vm1088, 1, 0
        %v1093 = vsel %vm1089, 1, 0
        %v1094 = vsel %vm1090, 1, 0
        %v1095 = vcvt.s32.f32 %v1091
        %v1096 = vcvt.s32.f32 %v1092
        %v1097 = vcvt.s32.f32 %v1093
        %v1098 = vcvt.s32.f32 %v1094
        %v1099 = vld [vmem:[#allocation7] sm:$0xff]
        %v1100 = vld [vmem:[#allocation7 + $0x8] sm:$0xff]
        %v1101 = vld [vmem:[#allocation7 + $0x10] sm:$0xff]
        %v1102 = vld [vmem:[#allocation7 + $0x18] sm:$0xff]
        %v1103 = vld [vmem:[#allocation7 + $0x20] sm:$0xff]
        %v1104 = vld [vmem:[#allocation7 + $0x28] sm:$0xff]
        %v1105 = vld [vmem:[#allocation7 + $0x30] sm:$0xff]
        %v1106 = vld [vmem:[#allocation7 + $0x38] sm:$0xff]
        %v1107 = vld [vmem:[#allocation7 + $0x40] sm:$0xff]
        %v1108 = vld [vmem:[#allocation7 + $0x48] sm:$0xff]
        %v1109 = vld [vmem:[#allocation7 + $0x50] sm:$0xff]
        %v1110 = vld [vmem:[#allocation7 + $0x58] sm:$0xff]
        %v1111 = vld [vmem:[#allocation7 + $0x60] sm:$0xff]
        %v1112 = vld [vmem:[#allocation7 + $0x68] sm:$0xff]
        %v1113 = vld [vmem:[#allocation7 + $0x70] sm:$0xff]
        %v1114 = vld [vmem:[#allocation7 + $0x78] sm:$0xff]
        %v1115 = vld [vmem:[#allocation7 + $0x80] sm:$0xff]
        %v1116 = vld [vmem:[#allocation7 + $0x88] sm:$0xff]
        %v1117 = vld [vmem:[#allocation7 + $0x90] sm:$0xff]
        %v1118 = vld [vmem:[#allocation7 + $0x98] sm:$0xff]
        %v1119 = vld [vmem:[#allocation7 + $0xa0] sm:$0xff]
        %v1120 = vld [vmem:[#allocation7 + $0xa8] sm:$0xff]
        %v1121 = vld [vmem:[#allocation7 + $0xb0] sm:$0xff]
        %v1122 = vld [vmem:[#allocation7 + $0xb8] sm:$0xff]
        %v1123 = vld [vmem:[#allocation7 + $0xc0] sm:$0xff]
        %v1124 = vld [vmem:[#allocation7 + $0xc8] sm:$0xff]
        %v1125 = vld [vmem:[#allocation7 + $0xd0] sm:$0xff]
        %v1126 = vld [vmem:[#allocation7 + $0xd8] sm:$0xff]
        %v1127 = vld [vmem:[#allocation7 + $0xe0] sm:$0xff]
        %v1128 = vld [vmem:[#allocation7 + $0xe8] sm:$0xff]
        %v1129 = vld [vmem:[#allocation7 + $0xf0] sm:$0xff]
        %v1130 = vld [vmem:[#allocation7 + $0xf8] sm:$0xff]
        %v1131 = vld [vmem:[#allocation7 + $0x100] sm:$0xff]
        %v1132 = vld [vmem:[#allocation7 + $0x108] sm:$0xff]
        %v1133 = vld [vmem:[#allocation7 + $0x110] sm:$0xff]
        %v1134 = vld [vmem:[#allocation7 + $0x118] sm:$0xff]
        %v1135 = vld [vmem:[#allocation7 + $0x120] sm:$0xff]
        %v1136 = vld [vmem:[#allocation7 + $0x128] sm:$0xff]
        %v1137 = vld [vmem:[#allocation7 + $0x130] sm:$0xff]
        %v1138 = vld [vmem:[#allocation7 + $0x138] sm:$0xff]
        %v1139 = vld [vmem:[#allocation7 + $0x140] sm:$0xff]
        %v1140 = vld [vmem:[#allocation7 + $0x148] sm:$0xff]
        %v1141 = vld [vmem:[#allocation7 + $0x150] sm:$0xff]
        %v1142 = vld [vmem:[#allocation7 + $0x158] sm:$0xff]
        %v1143 = vld [vmem:[#allocation7 + $0x160] sm:$0xff]
        %v1144 = vld [vmem:[#allocation7 + $0x168] sm:$0xff]
        %v1145 = vld [vmem:[#allocation7 + $0x170] sm:$0xff]
        %v1146 = vld [vmem:[#allocation7 + $0x178] sm:$0xff]
        %v1147 = vld [vmem:[#allocation7 + $0x180] sm:$0xff]
        %v1148 = vld [vmem:[#allocation7 + $0x188] sm:$0xff]
        %v1149 = vld [vmem:[#allocation7 + $0x190] sm:$0xff]
        %v1150 = vld [vmem:[#allocation7 + $0x198] sm:$0xff]
        %v1151 = vld [vmem:[#allocation7 + $0x1a0] sm:$0xff]
        %v1152 = vld [vmem:[#allocation7 + $0x1a8] sm:$0xff]
        %v1153 = vld [vmem:[#allocation7 + $0x1b0] sm:$0xff]
        %v1154 = vld [vmem:[#allocation7 + $0x1b8] sm:$0xff]
        %v1155 = vld [vmem:[#allocation7 + $0x1c0] sm:$0xff]
        %v1156 = vld [vmem:[#allocation7 + $0x1c8] sm:$0xff]
        %v1157 = vld [vmem:[#allocation7 + $0x1d0] sm:$0xff]
        %v1158 = vld [vmem:[#allocation7 + $0x1d8] sm:$0xff]
        %v1159 = vld [vmem:[#allocation7 + $0x1e0] sm:$0xff]
        %v1160 = vld [vmem:[#allocation7 + $0x1e8] sm:$0xff]
        %v1161 = vld [vmem:[#allocation7 + $0x1f0] sm:$0xff]
        %v1162 = vld [vmem:[#allocation7 + $0x1f8] sm:$0xff]
        %v1163 = vld [vmem:[#allocation7 + $0x200] sm:$0xff]
        %v1164 = vld [vmem:[#allocation7 + $0x208] sm:$0xff]
        %v1165 = vld [vmem:[#allocation7 + $0x210] sm:$0xff]
        %v1166 = vld [vmem:[#allocation7 + $0x218] sm:$0xff]
        %v1167 = vld [vmem:[#allocation7 + $0x220] sm:$0xff]
        %v1168 = vld [vmem:[#allocation7 + $0x228] sm:$0xff]
        %v1169 = vld [vmem:[#allocation7 + $0x230] sm:$0xff]
        %v1170 = vld [vmem:[#allocation7 + $0x238] sm:$0xff]
        %v1171 = vld [vmem:[#allocation7 + $0x240] sm:$0xff]
        %v1172 = vld [vmem:[#allocation7 + $0x248] sm:$0xff]
        %v1173 = vld [vmem:[#allocation7 + $0x250] sm:$0xff]
        %v1174 = vld [vmem:[#allocation7 + $0x258] sm:$0xff]
        %v1175 = vld [vmem:[#allocation7 + $0x260] sm:$0xff]
        %v1176 = vld [vmem:[#allocation7 + $0x268] sm:$0xff]
        %v1177 = vld [vmem:[#allocation7 + $0x270] sm:$0xff]
        %v1178 = vld [vmem:[#allocation7 + $0x278] sm:$0xff]
        %v1179 = vld [vmem:[#allocation7 + $0x280] sm:$0xff]
        %v1180 = vld [vmem:[#allocation7 + $0x288] sm:$0xff]
        %v1181 = vld [vmem:[#allocation7 + $0x290] sm:$0xff]
        %v1182 = vld [vmem:[#allocation7 + $0x298] sm:$0xff]
        %v1183 = vld [vmem:[#allocation7 + $0x2a0] sm:$0xff]
        %v1184 = vld [vmem:[#allocation7 + $0x2a8] sm:$0xff]
        %v1185 = vld [vmem:[#allocation7 + $0x2b0] sm:$0xff]
        %v1186 = vld [vmem:[#allocation7 + $0x2b8] sm:$0xff]
        %v1187 = vld [vmem:[#allocation7 + $0x2c0] sm:$0xff]
        %v1188 = vld [vmem:[#allocation7 + $0x2c8] sm:$0xff]
        %v1189 = vld [vmem:[#allocation7 + $0x2d0] sm:$0xff]
        %v1190 = vld [vmem:[#allocation7 + $0x2d8] sm:$0xff]
        %v1191 = vld [vmem:[#allocation7 + $0x2e0] sm:$0xff]
        %v1192 = vld [vmem:[#allocation7 + $0x2e8] sm:$0xff]
        %v1193 = vld [vmem:[#allocation7 + $0x2f0] sm:$0xff]
        %v1194 = vld [vmem:[#allocation7 + $0x2f8] sm:$0xff]
        %v1195 = vld [vmem:[#allocation7 + $0x300] sm:$0xff]
        %v1196 = vld [vmem:[#allocation7 + $0x308] sm:$0xff]
        %v1197 = vld [vmem:[#allocation7 + $0x310] sm:$0xff]
        %v1198 = vld [vmem:[#allocation7 + $0x318] sm:$0xff]
        %v1199 = vld [vmem:[#allocation7 + $0x320] sm:$0xff]
        %v1200 = vld [vmem:[#allocation7 + $0x328] sm:$0xff]
        %v1201 = vld [vmem:[#allocation7 + $0x330] sm:$0xff]
        %v1202 = vld [vmem:[#allocation7 + $0x338] sm:$0xff]
        %v1203 = vld [vmem:[#allocation7 + $0x340] sm:$0xff]
        %v1204 = vld [vmem:[#allocation7 + $0x348] sm:$0xff]
        %v1205 = vld [vmem:[#allocation7 + $0x350] sm:$0xff]
        %v1206 = vld [vmem:[#allocation7 + $0x358] sm:$0xff]
        %v1207 = vld [vmem:[#allocation7 + $0x360] sm:$0xff]
        %v1208 = vld [vmem:[#allocation7 + $0x368] sm:$0xff]
        %v1209 = vld [vmem:[#allocation7 + $0x370] sm:$0xff]
        %v1210 = vld [vmem:[#allocation7 + $0x378] sm:$0xff]
        %v1211 = vld [vmem:[#allocation7 + $0x380] sm:$0xff]
        %v1212 = vld [vmem:[#allocation7 + $0x388] sm:$0xff]
        %v1213 = vld [vmem:[#allocation7 + $0x390] sm:$0xff]
        %v1214 = vld [vmem:[#allocation7 + $0x398] sm:$0xff]
        %v1215 = vld [vmem:[#allocation7 + $0x3a0] sm:$0xff]
        %v1216 = vld [vmem:[#allocation7 + $0x3a8] sm:$0xff]
        %v1217 = vld [vmem:[#allocation7 + $0x3b0] sm:$0xff]
        %v1218 = vld [vmem:[#allocation7 + $0x3b8] sm:$0xff]
        %v1219 = vld [vmem:[#allocation7 + $0x3c0] sm:$0xff]
        %v1220 = vld [vmem:[#allocation7 + $0x3c8] sm:$0xff]
        %v1221 = vld [vmem:[#allocation7 + $0x3d0] sm:$0xff]
        %v1222 = vld [vmem:[#allocation7 + $0x3d8] sm:$0xff]
        %v1223 = vld [vmem:[#allocation7 + $0x3e0] sm:$0xff]
        %v1224 = vld [vmem:[#allocation7 + $0x3e8] sm:$0xff]
        %v1225 = vld [vmem:[#allocation7 + $0x3f0] sm:$0xff]
        %v1226 = vld [vmem:[#allocation7 + $0x3f8] sm:$0xff]
        %v1227 = vld [vmem:[#allocation7 + $0x400] sm:$0xff]
        %v1228 = vld [vmem:[#allocation7 + $0x408] sm:$0xff]
        %v1229 = vld [vmem:[#allocation7 + $0x410] sm:$0xff]
        %v1230 = vld [vmem:[#allocation7 + $0x418] sm:$0xff]
        %v1231 = vld [vmem:[#allocation7 + $0x420] sm:$0xff]
        %v1232 = vld [vmem:[#allocation7 + $0x428] sm:$0xff]
        %v1233 = vld [vmem:[#allocation7 + $0x430] sm:$0xff]
        %v1234 = vld [vmem:[#allocation7 + $0x438] sm:$0xff]
        %v1235 = vld [vmem:[#allocation7 + $0x440] sm:$0xff]
        %v1236 = vld [vmem:[#allocation7 + $0x448] sm:$0xff]
        %v1237 = vld [vmem:[#allocation7 + $0x450] sm:$0xff]
        %v1238 = vld [vmem:[#allocation7 + $0x458] sm:$0xff]
        %v1239 = vld [vmem:[#allocation7 + $0x460] sm:$0xff]
        %v1240 = vld [vmem:[#allocation7 + $0x468] sm:$0xff]
        %v1241 = vld [vmem:[#allocation7 + $0x470] sm:$0xff]
        %v1242 = vld [vmem:[#allocation7 + $0x478] sm:$0xff]
        %v1243 = vld [vmem:[#allocation7 + $0x480] sm:$0xff]
        %v1244 = vld [vmem:[#allocation7 + $0x488] sm:$0xff]
        %v1245 = vld [vmem:[#allocation7 + $0x490] sm:$0xff]
        %v1246 = vld [vmem:[#allocation7 + $0x498] sm:$0xff]
        %v1247 = vld [vmem:[#allocation7 + $0x4a0] sm:$0xff]
        %v1248 = vld [vmem:[#allocation7 + $0x4a8] sm:$0xff]
        %v1249 = vld [vmem:[#allocation7 + $0x4b0] sm:$0xff]
        %v1250 = vld [vmem:[#allocation7 + $0x4b8] sm:$0xff]
        %v1251 = vld [vmem:[#allocation7 + $0x4c0] sm:$0xff]
        %v1252 = vld [vmem:[#allocation7 + $0x4c8] sm:$0xff]
        %v1253 = vld [vmem:[#allocation7 + $0x4d0] sm:$0xff]
        %v1254 = vld [vmem:[#allocation7 + $0x4d8] sm:$0xff]
        %v1255 = vld [vmem:[#allocation7 + $0x4e0] sm:$0xff]
        %v1256 = vld [vmem:[#allocation7 + $0x4e8] sm:$0xff]
        %v1257 = vld [vmem:[#allocation7 + $0x4f0] sm:$0xff]
        %v1258 = vld [vmem:[#allocation7 + $0x4f8] sm:$0xff]
        %v1259 = vld [vmem:[#allocation7 + $0x500] sm:$0xff]
        %v1260 = vld [vmem:[#allocation7 + $0x508] sm:$0xff]
        %v1261 = vld [vmem:[#allocation7 + $0x510] sm:$0xff]
        %v1262 = vld [vmem:[#allocation7 + $0x518] sm:$0xff]
        %v1263 = vld [vmem:[#allocation7 + $0x520] sm:$0xff]
        %v1264 = vld [vmem:[#allocation7 + $0x528] sm:$0xff]
        %v1265 = vld [vmem:[#allocation7 + $0x530] sm:$0xff]
        %v1266 = vld [vmem:[#allocation7 + $0x538] sm:$0xff]
        %v1267 = vld [vmem:[#allocation7 + $0x540] sm:$0xff]
        %v1268 = vld [vmem:[#allocation7 + $0x548] sm:$0xff]
        %v1269 = vld [vmem:[#allocation7 + $0x550] sm:$0xff]
        %v1270 = vld [vmem:[#allocation7 + $0x558] sm:$0xff]
        %v1271 = vld [vmem:[#allocation7 + $0x560] sm:$0xff]
        %v1272 = vld [vmem:[#allocation7 + $0x568] sm:$0xff]
        %v1273 = vld [vmem:[#allocation7 + $0x570] sm:$0xff]
        %v1274 = vld [vmem:[#allocation7 + $0x578] sm:$0xff]
        %v1275 = vld [vmem:[#allocation7 + $0x580] sm:$0xff]
        %v1276 = vld [vmem:[#allocation7 + $0x588] sm:$0xff]
        %v1277 = vld [vmem:[#allocation7 + $0x590] sm:$0xff]
        %v1278 = vld [vmem:[#allocation7 + $0x598] sm:$0xff]
        %v1279 = vld [vmem:[#allocation7 + $0x5a0] sm:$0xff]
        %v1280 = vld [vmem:[#allocation7 + $0x5a8] sm:$0xff]
        %v1281 = vld [vmem:[#allocation7 + $0x5b0] sm:$0xff]
        %v1282 = vld [vmem:[#allocation7 + $0x5b8] sm:$0xff]
        %v1283 = vld [vmem:[#allocation7 + $0x5c0] sm:$0xff]
        %v1284 = vld [vmem:[#allocation7 + $0x5c8] sm:$0xff]
        %v1285 = vld [vmem:[#allocation7 + $0x5d0] sm:$0xff]
        %v1286 = vld [vmem:[#allocation7 + $0x5d8] sm:$0xff]
        %v1287 = vld [vmem:[#allocation7 + $0x5e0] sm:$0xff]
        %v1288 = vld [vmem:[#allocation7 + $0x5e8] sm:$0xff]
        %v1289 = vld [vmem:[#allocation7 + $0x5f0] sm:$0xff]
        %v1290 = vld [vmem:[#allocation7 + $0x5f8] sm:$0xff]
        %v1291 = vld [vmem:[#allocation7 + $0x600] sm:$0xff]
        %v1292 = vld [vmem:[#allocation7 + $0x608] sm:$0xff]
        %v1293 = vld [vmem:[#allocation7 + $0x610] sm:$0xff]
        %v1294 = vld [vmem:[#allocation7 + $0x618] sm:$0xff]
        %v1295 = vld [vmem:[#allocation7 + $0x620] sm:$0xff]
        %v1296 = vld [vmem:[#allocation7 + $0x628] sm:$0xff]
        %v1297 = vld [vmem:[#allocation7 + $0x630] sm:$0xff]
        %v1298 = vld [vmem:[#allocation7 + $0x638] sm:$0xff]
        %v1299 = vld [vmem:[#allocation7 + $0x640] sm:$0xff]
        %v1300 = vld [vmem:[#allocation7 + $0x648] sm:$0xff]
        %v1301 = vld [vmem:[#allocation7 + $0x650] sm:$0xff]
        %v1302 = vld [vmem:[#allocation7 + $0x658] sm:$0xff]
        %v1303 = vld [vmem:[#allocation7 + $0x660] sm:$0xff]
        %v1304 = vld [vmem:[#allocation7 + $0x668] sm:$0xff]
        %v1305 = vld [vmem:[#allocation7 + $0x670] sm:$0xff]
        %v1306 = vld [vmem:[#allocation7 + $0x678] sm:$0xff]
        %v1307 = vld [vmem:[#allocation7 + $0x680] sm:$0xff]
        %v1308 = vld [vmem:[#allocation7 + $0x688] sm:$0xff]
        %v1309 = vld [vmem:[#allocation7 + $0x690] sm:$0xff]
        %v1310 = vld [vmem:[#allocation7 + $0x698] sm:$0xff]
        %v1311 = vld [vmem:[#allocation7 + $0x6a0] sm:$0xff]
        %v1312 = vld [vmem:[#allocation7 + $0x6a8] sm:$0xff]
        %v1313 = vld [vmem:[#allocation7 + $0x6b0] sm:$0xff]
        %v1314 = vld [vmem:[#allocation7 + $0x6b8] sm:$0xff]
        %v1315 = vld [vmem:[#allocation7 + $0x6c0] sm:$0xff]
        %v1316 = vld [vmem:[#allocation7 + $0x6c8] sm:$0xff]
        %v1317 = vld [vmem:[#allocation7 + $0x6d0] sm:$0xff]
        %v1318 = vld [vmem:[#allocation7 + $0x6d8] sm:$0xff]
        %v1319 = vld [vmem:[#allocation7 + $0x6e0] sm:$0xff]
        %v1320 = vld [vmem:[#allocation7 + $0x6e8] sm:$0xff]
        %v1321 = vld [vmem:[#allocation7 + $0x6f0] sm:$0xff]
        %v1322 = vld [vmem:[#allocation7 + $0x6f8] sm:$0xff]
        %v1323 = vld [vmem:[#allocation7 + $0x700] sm:$0xff]
        %v1324 = vld [vmem:[#allocation7 + $0x708] sm:$0xff]
        %v1325 = vld [vmem:[#allocation7 + $0x710] sm:$0xff]
        %v1326 = vld [vmem:[#allocation7 + $0x718] sm:$0xff]
        %v1327 = vld [vmem:[#allocation7 + $0x720] sm:$0xff]
        %v1328 = vld [vmem:[#allocation7 + $0x728] sm:$0xff]
        %v1329 = vld [vmem:[#allocation7 + $0x730] sm:$0xff]
        %v1330 = vld [vmem:[#allocation7 + $0x738] sm:$0xff]
        %v1331 = vld [vmem:[#allocation7 + $0x740] sm:$0xff]
        %v1332 = vld [vmem:[#allocation7 + $0x748] sm:$0xff]
        %v1333 = vld [vmem:[#allocation7 + $0x750] sm:$0xff]
        %v1334 = vld [vmem:[#allocation7 + $0x758] sm:$0xff]
        %v1335 = vld [vmem:[#allocation7 + $0x760] sm:$0xff]
        %v1336 = vld [vmem:[#allocation7 + $0x768] sm:$0xff]
        %v1337 = vld [vmem:[#allocation7 + $0x770] sm:$0xff]
        %v1338 = vld [vmem:[#allocation7 + $0x778] sm:$0xff]
        %v1339 = vld [vmem:[#allocation7 + $0x780] sm:$0xff]
        %v1340 = vld [vmem:[#allocation7 + $0x788] sm:$0xff]
        %v1341 = vld [vmem:[#allocation7 + $0x790] sm:$0xff]
        %v1342 = vld [vmem:[#allocation7 + $0x798] sm:$0xff]
        %v1343 = vld [vmem:[#allocation7 + $0x7a0] sm:$0xff]
        %v1344 = vld [vmem:[#allocation7 + $0x7a8] sm:$0xff]
        %v1345 = vld [vmem:[#allocation7 + $0x7b0] sm:$0xff]
        %v1346 = vld [vmem:[#allocation7 + $0x7b8] sm:$0xff]
        %v1347 = vld [vmem:[#allocation7 + $0x7c0] sm:$0xff]
        %v1348 = vld [vmem:[#allocation7 + $0x7c8] sm:$0xff]
        %v1349 = vld [vmem:[#allocation7 + $0x7d0] sm:$0xff]
        %v1350 = vld [vmem:[#allocation7 + $0x7d8] sm:$0xff]
        %v1351 = vld [vmem:[#allocation7 + $0x7e0] sm:$0xff]
        %v1352 = vld [vmem:[#allocation7 + $0x7e8] sm:$0xff]
        %v1353 = vld [vmem:[#allocation7 + $0x7f0] sm:$0xff]
        %v1354 = vld [vmem:[#allocation7 + $0x7f8] sm:$0xff]
        %1355 = vmatprep.subr.mxu0 %v1100
        %1356 = vmatpush1.msra.mxu0 %v1099
        %1357 = vmatprep.subr.mxu0 %v1104
        %1358 = vmatpush1.msra.mxu0 %v1103
        %1359 = vmatprep.subr.mxu0 %v1108
        %1360 = vmatpush1.msra.mxu0 %v1107
        %1361 = vmatprep.subr.mxu0 %v1112
        %1362 = vmatpush1.msra.mxu0 %v1111
        %1363 = vmatprep.subr.mxu0 %v1116
        %1364 = vmatpush1.msra.mxu0 %v1115
        %1365 = vmatprep.subr.mxu0 %v1120
        %1366 = vmatpush1.msra.mxu0 %v1119
        %1367 = vmatprep.subr.mxu0 %v1124
        %1368 = vmatpush1.msra.mxu0 %v1123
        %1369 = vmatprep.subr.mxu0 %v1128
        %1370 = vmatpush1.msra.mxu0 %v1127
        %1371 = vmatprep.subr.mxu0 %v1132
        %1372 = vmatpush1.msra.mxu0 %v1131
        %1373 = vmatprep.subr.mxu0 %v1136
        %1374 = vmatpush1.msra.mxu0 %v1135
        %1375 = vmatprep.subr.mxu0 %v1140
        %1376 = vmatpush1.msra.mxu0 %v1139
        %1377 = vmatprep.subr.mxu0 %v1144
        %1378 = vmatpush1.msra.mxu0 %v1143
        %1379 = vmatprep.subr.mxu0 %v1148
        %1380 = vmatpush1.msra.mxu0 %v1147
        %1381 = vmatprep.subr.mxu0 %v1152
        %1382 = vmatpush1.msra.mxu0 %v1151
        %1383 = vmatprep.subr.mxu0 %v1156
        %1384 = vmatpush1.msra.mxu0 %v1155
        %1385 = vmatprep.subr.mxu0 %v1160
        %1386 = vmatpush1.msra.mxu0 %v1159
        %1387 = vmatprep.subr.mxu0 %v1164
        %1388 = vmatpush1.msra.mxu0 %v1163
        %1389 = vmatprep.subr.mxu0 %v1168
        %1390 = vmatpush1.msra.mxu0 %v1167
        %1391 = vmatprep.subr.mxu0 %v1172
        %1392 = vmatpush1.msra.mxu0 %v1171
        %1393 = vmatprep.subr.mxu0 %v1176
        %1394 = vmatpush1.msra.mxu0 %v1175
        %1395 = vmatprep.subr.mxu0 %v1180
        %1396 = vmatpush1.msra.mxu0 %v1179
        %1397 = vmatprep.subr.mxu0 %v1184
        %1398 = vmatpush1.msra.mxu0 %v1183
        %1399 = vmatprep.subr.mxu0 %v1188
        %1400 = vmatpush1.msra.mxu0 %v1187
        %1401 = vmatprep.subr.mxu0 %v1192
        %1402 = vmatpush1.msra.mxu0 %v1191
        %1403 = vmatprep.subr.mxu0 %v1196
        %1404 = vmatpush1.msra.mxu0 %v1195
        %1405 = vmatprep.subr.mxu0 %v1200
        %1406 = vmatpush1.msra.mxu0 %v1199
        %1407 = vmatprep.subr.mxu0 %v1204
        %1408 = vmatpush1.msra.mxu0 %v1203
        %1409 = vmatprep.subr.mxu0 %v1208
        %1410 = vmatpush1.msra.mxu0 %v1207
        %1411 = vmatprep.subr.mxu0 %v1212
        %1412 = vmatpush1.msra.mxu0 %v1211
        %1413 = vmatprep.subr.mxu0 %v1216
        %1414 = vmatpush1.msra.mxu0 %v1215
        %1415 = vmatprep.subr.mxu0 %v1220
        %1416 = vmatpush1.msra.mxu0 %v1219
        %1417 = vmatprep.subr.mxu0 %v1224
        %1418 = vmatpush1.msra.mxu0 %v1223
        %1419 = vmatprep.mubr.f32.mxu0 %v1096
        %1420 = vmatmul.mubr.f32.gmra.mrb[0].mxu0 %v1095
        %v1421 = vpop.f32.mrb[0].mxu0
        %v1422 = vadd.f32 0.0, %v1421
        %v1423 = vpop.f32.mrb[0].mxu0
        %v1424 = vadd.f32 0.0, %v1423
        %1425 = vdwg.mxu0
        %1426 = vmatprep.subr.mxu0 %v1228
        %1427 = vmatpush1.msra.mxu0 %v1227
        %1428 = vmatprep.subr.mxu0 %v1232
        %1429 = vmatpush1.msra.mxu0 %v1231
        %1430 = vmatprep.subr.mxu0 %v1236
        %1431 = vmatpush1.msra.mxu0 %v1235
        %1432 = vmatprep.subr.mxu0 %v1240
        %1433 = vmatpush1.msra.mxu0 %v1239
        %1434 = vmatprep.subr.mxu0 %v1244
        %1435 = vmatpush1.msra.mxu0 %v1243
        %1436 = vmatprep.subr.mxu0 %v1248
        %1437 = vmatpush1.msra.mxu0 %v1247
        %1438 = vmatprep.subr.mxu0 %v1252
        %1439 = vmatpush1.msra.mxu0 %v1251
        %1440 = vmatprep.subr.mxu0 %v1256
        %1441 = vmatpush1.msra.mxu0 %v1255
        %1442 = vmatprep.subr.mxu0 %v1260
        %1443 = vmatpush1.msra.mxu0 %v1259
        %1444 = vmatprep.subr.mxu0 %v1264
        %1445 = vmatpush1.msra.mxu0 %v1263
        %1446 = vmatprep.subr.mxu0 %v1268
        %1447 = vmatpush1.msra.mxu0 %v1267
        %1448 = vmatprep.subr.mxu0 %v1272
        %1449 = vmatpush1.msra.mxu0 %v1271
        %1450 = vmatprep.subr.mxu0 %v1276
        %1451 = vmatpush1.msra.mxu0 %v1275
        %1452 = vmatprep.subr.mxu0 %v1280
        %1453 = vmatpush1.msra.mxu0 %v1279
        %1454 = vmatprep.subr.mxu0 %v1284
        %1455 = vmatpush1.msra.mxu0 %v1283
        %1456 = vmatprep.subr.mxu0 %v1288
        %1457 = vmatpush1.msra.mxu0 %v1287
        %1458 = vmatprep.subr.mxu0 %v1292
        %1459 = vmatpush1.msra.mxu0 %v1291
        %1460 = vmatprep.subr.mxu0 %v1296
        %1461 = vmatpush1.msra.mxu0 %v1295
        %1462 = vmatprep.subr.mxu0 %v1300
        %1463 = vmatpush1.msra.mxu0 %v1299
        %1464 = vmatprep.subr.mxu0 %v1304
        %1465 = vmatpush1.msra.mxu0 %v1303
        %1466 = vmatprep.subr.mxu0 %v1308
        %1467 = vmatpush1.msra.mxu0 %v1307
        %1468 = vmatprep.subr.mxu0 %v1312
        %1469 = vmatpush1.msra.mxu0 %v1311
        %1470 = vmatprep.subr.mxu0 %v1316
        %1471 = vmatpush1.msra.mxu0 %v1315
        %1472 = vmatprep.subr.mxu0 %v1320
        %1473 = vmatpush1.msra.mxu0 %v1319
        %1474 = vmatprep.subr.mxu0 %v1324
        %1475 = vmatpush1.msra.mxu0 %v1323
        %1476 = vmatprep.subr.mxu0 %v1328
        %1477 = vmatpush1.msra.mxu0 %v1327
        %1478 = vmatprep.subr.mxu0 %v1332
        %1479 = vmatpush1.msra.mxu0 %v1331
        %1480 = vmatprep.subr.mxu0 %v1336
        %1481 = vmatpush1.msra.mxu0 %v1335
        %1482 = vmatprep.subr.mxu0 %v1340
        %1483 = vmatpush1.msra.mxu0 %v1339
        %1484 = vmatprep.subr.mxu0 %v1344
        %1485 = vmatpush1.msra.mxu0 %v1343
        %1486 = vmatprep.subr.mxu0 %v1348
        %1487 = vmatpush1.msra.mxu0 %v1347
        %1488 = vmatprep.subr.mxu0 %v1352
        %1489 = vmatpush1.msra.mxu0 %v1351
        %1490 = vmatprep.mubr.f32.mxu0 %v1098
        %1491 = vmatmul.mubr.f32.gmra.mrb[0].mxu0 %v1097
        %v1492 = vpop.f32.mrb[0].mxu0
        %v1493 = vadd.f32 %v1422, %v1492
        %v1494 = vpop.f32.mrb[0].mxu0
        %v1495 = vadd.f32 %v1424, %v1494
        %1496 = vdwg.mxu0
        %1497 = vmatprep.subr.mxu0 %v1102
        %1498 = vmatpush1.msra.mxu0 %v1101
        %1499 = vmatprep.subr.mxu0 %v1106
        %1500 = vmatpush1.msra.mxu0 %v1105
        %1501 = vmatprep.subr.mxu0 %v1110
        %1502 = vmatpush1.msra.mxu0 %v1109
        %1503 = vmatprep.subr.mxu0 %v1114
        %1504 = vmatpush1.msra.mxu0 %v1113
        %1505 = vmatprep.subr.mxu0 %v1118
        %1506 = vmatpush1.msra.mxu0 %v1117
        %1507 = vmatprep.subr.mxu0 %v1122
        %1508 = vmatpush1.msra.mxu0 %v1121
        %1509 = vmatprep.subr.mxu0 %v1126
        %1510 = vmatpush1.msra.mxu0 %v1125
        %1511 = vmatprep.subr.mxu0 %v1130
        %1512 = vmatpush1.msra.mxu0 %v1129
        %1513 = vmatprep.subr.mxu0 %v1134
        %1514 = vmatpush1.msra.mxu0 %v1133
        %1515 = vmatprep.subr.mxu0 %v1138
        %1516 = vmatpush1.msra.mxu0 %v1137
        %1517 = vmatprep.subr.mxu0 %v1142
        %1518 = vmatpush1.msra.mxu0 %v1141
        %1519 = vmatprep.subr.mxu0 %v1146
        %1520 = vmatpush1.msra.mxu0 %v1145
        %1521 = vmatprep.subr.mxu0 %v1150
        %1522 = vmatpush1.msra.mxu0 %v1149
        %1523 = vmatprep.subr.mxu0 %v1154
        %1524 = vmatpush1.msra.mxu0 %v1153
        %1525 = vmatprep.subr.mxu0 %v1158
        %1526 = vmatpush1.msra.mxu0 %v1157
        %1527 = vmatprep.subr.mxu0 %v1162
        %1528 = vmatpush1.msra.mxu0 %v1161
        %1529 = vmatprep.subr.mxu0 %v1166
        %1530 = vmatpush1.msra.mxu0 %v1165
        %1531 = vmatprep.subr.mxu0 %v1170
        %1532 = vmatpush1.msra.mxu0 %v1169
        %1533 = vmatprep.subr.mxu0 %v1174
        %1534 = vmatpush1.msra.mxu0 %v1173
        %1535 = vmatprep.subr.mxu0 %v1178
        %1536 = vmatpush1.msra.mxu0 %v1177
        %1537 = vmatprep.subr.mxu0 %v1182
        %1538 = vmatpush1.msra.mxu0 %v1181
        %1539 = vmatprep.subr.mxu0 %v1186
        %1540 = vmatpush1.msra.mxu0 %v1185
        %1541 = vmatprep.subr.mxu0 %v1190
        %1542 = vmatpush1.msra.mxu0 %v1189
        %1543 = vmatprep.subr.mxu0 %v1194
        %1544 = vmatpush1.msra.mxu0 %v1193
        %1545 = vmatprep.subr.mxu0 %v1198
        %1546 = vmatpush1.msra.mxu0 %v1197
        %1547 = vmatprep.subr.mxu0 %v1202
        %1548 = vmatpush1.msra.mxu0 %v1201
        %1549 = vmatprep.subr.mxu0 %v1206
        %1550 = vmatpush1.msra.mxu0 %v1205
        %1551 = vmatprep.subr.mxu0 %v1210
        %1552 = vmatpush1.msra.mxu0 %v1209
        %1553 = vmatprep.subr.mxu0 %v1214
        %1554 = vmatpush1.msra.mxu0 %v1213
        %1555 = vmatprep.subr.mxu0 %v1218
        %1556 = vmatpush1.msra.mxu0 %v1217
        %1557 = vmatprep.subr.mxu0 %v1222
        %1558 = vmatpush1.msra.mxu0 %v1221
        %1559 = vmatprep.subr.mxu0 %v1226
        %1560 = vmatpush1.msra.mxu0 %v1225
        %1561 = vmatprep.mubr.f32.mxu0 %v1096
        %1562 = vmatmul.mubr.f32.gmra.mrb[0].mxu0 %v1095
        %v1563 = vpop.f32.mrb[0].mxu0
        %v1564 = vadd.f32 0.0, %v1563
        %v1565 = vpop.f32.mrb[0].mxu0
        %v1566 = vadd.f32 0.0, %v1565
        %1567 = vdwg.mxu0
        %1568 = vmatprep.subr.mxu0 %v1230
        %1569 = vmatpush1.msra.mxu0 %v1229
        %1570 = vmatprep.subr.mxu0 %v1234
        %1571 = vmatpush1.msra.mxu0 %v1233
        %1572 = vmatprep.subr.mxu0 %v1238
        %1573 = vmatpush1.msra.mxu0 %v1237
        %1574 = vmatprep.subr.mxu0 %v1242
        %1575 = vmatpush1.msra.mxu0 %v1241
        %1576 = vmatprep.subr.mxu0 %v1246
        %1577 = vmatpush1.msra.mxu0 %v1245
        %1578 = vmatprep.subr.mxu0 %v1250
        %1579 = vmatpush1.msra.mxu0 %v1249
        %1580 = vmatprep.subr.mxu0 %v1254
        %1581 = vmatpush1.msra.mxu0 %v1253
        %1582 = vmatprep.subr.mxu0 %v1258
        %1583 = vmatpush1.msra.mxu0 %v1257
        %1584 = vmatprep.subr.mxu0 %v1262
        %1585 = vmatpush1.msra.mxu0 %v1261
        %1586 = vmatprep.subr.mxu0 %v1266
        %1587 = vmatpush1.msra.mxu0 %v1265
        %1588 = vmatprep.subr.mxu0 %v1270
        %1589 = vmatpush1.msra.mxu0 %v1269
        %1590 = vmatprep.subr.mxu0 %v1274
        %1591 = vmatpush1.msra.mxu0 %v1273
        %1592 = vmatprep.subr.mxu0 %v1278
        %1593 = vmatpush1.msra.mxu0 %v1277
        %1594 = vmatprep.subr.mxu0 %v1282
        %1595 = vmatpush1.msra.mxu0 %v1281
        %1596 = vmatprep.subr.mxu0 %v1286
        %1597 = vmatpush1.msra.mxu0 %v1285
        %1598 = vmatprep.subr.mxu0 %v1290
        %1599 = vmatpush1.msra.mxu0 %v1289
        %1600 = vmatprep.subr.mxu0 %v1294
        %1601 = vmatpush1.msra.mxu0 %v1293
        %1602 = vmatprep.subr.mxu0 %v1298
        %1603 = vmatpush1.msra.mxu0 %v1297
        %1604 = vmatprep.subr.mxu0 %v1302
        %1605 = vmatpush1.msra.mxu0 %v1301
        %1606 = vmatprep.subr.mxu0 %v1306
        %1607 = vmatpush1.msra.mxu0 %v1305
        %1608 = vmatprep.subr.mxu0 %v1310
        %1609 = vmatpush1.msra.mxu0 %v1309
        %1610 = vmatprep.subr.mxu0 %v1314
        %1611 = vmatpush1.msra.mxu0 %v1313
        %1612 = vmatprep.subr.mxu0 %v1318
        %1613 = vmatpush1.msra.mxu0 %v1317
        %1614 = vmatprep.subr.mxu0 %v1322
        %1615 = vmatpush1.msra.mxu0 %v1321
        %1616 = vmatprep.subr.mxu0 %v1326
        %1617 = vmatpush1.msra.mxu0 %v1325
        %1618 = vmatprep.subr.mxu0 %v1330
        %1619 = vmatpush1.msra.mxu0 %v1329
        %1620 = vmatprep.subr.mxu0 %v1334
        %1621 = vmatpush1.msra.mxu0 %v1333
        %1622 = vmatprep.subr.mxu0 %v1338
        %1623 = vmatpush1.msra.mxu0 %v1337
        %1624 = vmatprep.subr.mxu0 %v1342
        %1625 = vmatpush1.msra.mxu0 %v1341
        %1626 = vmatprep.subr.mxu0 %v1346
        %1627 = vmatpush1.msra.mxu0 %v1345
        %1628 = vmatprep.subr.mxu0 %v1350
        %1629 = vmatpush1.msra.mxu0 %v1349
        %1630 = vmatprep.subr.mxu0 %v1354
        %1631 = vmatpush1.msra.mxu0 %v1353
        %1632 = vmatprep.mubr.f32.mxu0 %v1098
        %1633 = vmatmul.mubr.f32.gmra.mrb[0].mxu0 %v1097
        %v1634 = vpop.f32.mrb[0].mxu0
        %v1635 = vadd.f32 %v1564, %v1634
        %v1636 = vpop.f32.mrb[0].mxu0
        %v1637 = vadd.f32 %v1566, %v1636
        %1638 = vdwg.mxu0
        %vm1639 = vcmp.ne.f32.partialorder %v859, 0.0
        %vm1640 = vcmp.ne.f32.partialorder %v861, 0.0
        %vm1641 = vcmp.ne.f32.partialorder %v1072, 0.0
        %vm1642 = vcmp.ne.f32.partialorder %v1074, 0.0
        %v1643 = vsel %vm1639, %v859, %v1493
        %v1644 = vsel %vm1640, %v861, %v1495
        %v1645 = vsel %vm1641, %v1072, %v1635
        %v1646 = vsel %vm1642, %v1074, %v1637
        %1647 = vst [vmem:[%s255] sm:$0xff] %v1643
        %1648 = vst [vmem:[%s255 + $0x8] sm:$0xff] %v1644
        %1649 = vst [vmem:[%s255 + $0x10] sm:$0xff] %v1645
        %1650 = vst [vmem:[%s255 + $0x18] sm:$0xff] %v1646
        %s1651 = sand.u32 %s124, 1
        %s1652 = scalar_lea.sflag [#allocation4], %s1651
        %s1653 = sand.u32 %s124, 1
        %s1654 = smul.addr %s1653, 32
        %s1655 = scalar_lea.vmem [#allocation8], %s1654
        // Predicated region
        $region49: #{tpu_custom_call.1} parent=35 // pred_check
          %p1656 = pneg %p134
        $region50: #{tpu_custom_call.1} parent=35 // pred_check_branch
          %1658 = sbr.rel (%p1656) target = $region52
        $region51: #{tpu_custom_call.1} parent=35 // pred_region
          %s1660 = ssub.s32 512, 512
          %1661 = vsyncadd %s1652, %s1660
          %s1662 = smul.addr %s22, 4
          %s1663 = smul.addr %s1662, 128
          %s1664 = scalar_lea.hbm %s4, %s1663
          %s1666 = sshll.u32 %s1655, 4
          %s1667 = int_to_ptr.vmem [resolvable:$true] %s1666
          %1669 = dma.vmem_to_hbm [thread:$0]  %s1667, 512, %s1664, %s1652
        $region52: #{tpu_custom_call.1} parent=35 // pred_fallthru
          _
      $region36: #{tpu_custom_call.1} parent=5 // pred_fallthru
        _
      %p1670 = scmp.le.s32.totalorder 2, %s17
      // Predicated region
      $region53: #{tpu_custom_call.1} parent=5 // pred_check
        %p1671 = pneg %p1670
      $region54: #{tpu_custom_call.1} parent=5 // pred_check_branch
        %1673 = sbr.rel (%p1671) target = $region56
      $region55: #{tpu_custom_call.1} parent=5 // pred_region
        %s1674 = ssub.s32 %s17, 2
        // Predicated region
        $region57: #{tpu_custom_call.1} parent=55 // pred_check
          %p1675 = pneg %p140
        $region58: #{tpu_custom_call.1} parent=55 // pred_check_branch
          %1677 = sbr.rel (%p1675) target = $region60
        $region59: #{tpu_custom_call.1} parent=55 // pred_region
          %s1678 = sand.u32 %s125, 1
          %s1679 = scalar_lea.sflag [#allocation4], %s1678
          %s1680 = sand.u32 %s125, 1
          %s1681 = smul.addr %s1680, 32
          %s1682 = scalar_lea.vmem [#allocation8], %s1681
          %1683 = dma.done %s1679, 512
        $region60: #{tpu_custom_call.1} parent=55 // pred_fallthru
          _
      $region56: #{tpu_custom_call.1} parent=5 // pred_fallthru
        _
    $region6: #{tpu_custom_call.1} parent=1 // loop_footer
      %s21 = sadd.s32 1, %s17
    $region7: #{tpu_custom_call.1} parent=1 // loop_footer_branch
      %16 = sbr.rel target = $region3
    $region8: #{tpu_custom_call.1} parent=1 // loop_exit
      _
    %1684 = vsyncpa [#allocation3], 1
    %s1685 = scalar_lea.sflag [#allocation3], 1
    %1686 = vsyncpa %s1685, 1
    %1687 = vsyncpa [#allocation6], 1
    %1688 = vsyncpa [#allocation4], 1
    %s1689 = scalar_lea.sflag [#allocation4], 1
    %1690 = vsyncpa %s1689, 1

</llo_original>
